<compile_context>
chip_gen: v5e
topology: v5e:2x2
jax: 0.10.0
libtpu: 0.0.40
codegen_flags: <defaults>
</compile_context>

<pallas_src>
import math
from functools import partial

import jax
import jax.numpy as jnp
from jax import lax
from jax.experimental import pallas as pl
from jax.experimental.pallas import tpu as pltpu

COMPUTE_DTYPE = jnp.bfloat16   # MXU operand dtype (accumulation stays f32)


# ---------------------------------------------------------------------------
# Tiling helper
# ---------------------------------------------------------------------------
def _pick_tile(dim, preferred, aligns=(256, 128, 8)):
    """Largest aligned tile that divides `dim` and is <= `preferred`; else dim."""
    if dim <= preferred:
        return dim
    for a in aligns:
        t = (preferred // a) * a
        while t >= a:
            if dim % t == 0:
                return t
            t -= a
    return dim


# ---------------------------------------------------------------------------
# Kernels
# ---------------------------------------------------------------------------
def _ln_matmul_kernel(x_ref, g_ref, b_ref, w_ref, bias_ref, o_ref, *, activation):
    # LayerNorm (f32 statistics) fused into the matmul prologue.
    x = x_ref[...].astype(jnp.float32)
    mu = jnp.mean(x, axis=-1, keepdims=True)
    var = jnp.mean(jnp.square(x - mu), axis=-1, keepdims=True)
    h = (x - mu) * lax.rsqrt(var + 1e-5)
    h = h * g_ref[...] + b_ref[...]
    y = jnp.dot(h.astype(w_ref.dtype), w_ref[...],
                preferred_element_type=jnp.float32)
    y = y + bias_ref[...]
    if activation == "gelu":   # exact (erf) GELU — torch nn.GELU default
        y = 0.5 * y * (1.0 + lax.erf(y * (1.0 / math.sqrt(2.0))))
    o_ref[...] = y.astype(o_ref.dtype)


def _matmul_residual_kernel(x_ref, w_ref, b_ref, r_ref, o_ref):
    y = jnp.dot(x_ref[...].astype(w_ref.dtype), w_ref[...],
                preferred_element_type=jnp.float32)
    y = y + b_ref[...] + r_ref[...].astype(jnp.float32)
    o_ref[...] = y.astype(o_ref.dtype)


def _attn_kernel(qkv_ref, o_ref, *, heads, dh, scale):
    # One batch element per grid step; all heads processed in-kernel so the
    # stored output block keeps the full (lane-dense) E = heads*dh last dim.
    # TODO(synk): for large S switch to a K/V-tiled flash-style online softmax
    #             (this kernel holds a full SxS f32 score matrix per head).
    E = heads * dh
    qkv = qkv_ref[0]                              # (S, 3E), f32
    outs = []
    for h in range(heads):                        # heads is static -> unrolled
        qh = qkv[:, h * dh:(h + 1) * dh].astype(COMPUTE_DTYPE)
        kh = qkv[:, E + h * dh:E + (h + 1) * dh].astype(COMPUTE_DTYPE)
        vh = qkv[:, 2 * E + h * dh:2 * E + (h + 1) * dh].astype(COMPUTE_DTYPE)
        # contract last dims directly — no materialized K transpose
        s = lax.dot_general(qh, kh, (((1,), (1,)), ((), ())),
                            preferred_element_type=jnp.float32) * scale
        s = s - jnp.max(s, axis=-1, keepdims=True)
        p = jnp.exp(s)                                            # f32 softmax
        p = p * pl.reciprocal(jnp.sum(p, axis=-1, keepdims=True), approx=True)
        outs.append(jnp.dot(p.astype(COMPUTE_DTYPE), vh,
                            preferred_element_type=jnp.float32))
    o_ref[0] = jnp.concatenate(outs, axis=-1).astype(o_ref.dtype)


# ---------------------------------------------------------------------------
# pallas_call wrappers
# ---------------------------------------------------------------------------
def ln_matmul(x2d, g, b, w, bias, *, activation=None):
    n, d = x2d.shape
    dout = w.shape[1]
    tm = _pick_tile(n, 256)
    tn = _pick_tile(dout, 512)
    cost = pl.CostEstimate(
        flops=2 * n * d * dout,
        transcendentals=(n * dout if activation == "gelu" else 0),
        bytes_accessed=n * d * 4 + d * dout * w.dtype.itemsize + n * dout * 4)
    return pl.pallas_call(
        partial(_ln_matmul_kernel, activation=activation),
        grid=(n // tm, dout // tn),
        in_specs=[
            pl.BlockSpec((tm, d), lambda i, j: (i, 0)),
            pl.BlockSpec((1, d), lambda i, j: (0, 0)),
            pl.BlockSpec((1, d), lambda i, j: (0, 0)),
            pl.BlockSpec((d, tn), lambda i, j: (0, j)),
            pl.BlockSpec((1, tn), lambda i, j: (0, j)),
        ],
        out_specs=pl.BlockSpec((tm, tn), lambda i, j: (i, j)),
        out_shape=jax.ShapeDtypeStruct((n, dout), x2d.dtype),
        cost_estimate=cost,
        compiler_params=pltpu.CompilerParams(
            dimension_semantics=("parallel", "parallel")),
    )(x2d, g.reshape(1, d), b.reshape(1, d), w, bias.reshape(1, dout))


def matmul_residual(x2d, w, bias, res2d):
    n, din = x2d.shape
    dout = w.shape[1]
    tm = _pick_tile(n, 256)
    tn = _pick_tile(dout, 512)
    cost = pl.CostEstimate(
        flops=2 * n * din * dout,
        transcendentals=0,
        bytes_accessed=n * din * 4 + din * dout * w.dtype.itemsize
        + 2 * n * dout * 4)
    return pl.pallas_call(
        _matmul_residual_kernel,
        grid=(n // tm, dout // tn),
        in_specs=[
            pl.BlockSpec((tm, din), lambda i, j: (i, 0)),
            pl.BlockSpec((din, tn), lambda i, j: (0, j)),
            pl.BlockSpec((1, tn), lambda i, j: (0, j)),
            pl.BlockSpec((tm, tn), lambda i, j: (i, j)),
        ],
        out_specs=pl.BlockSpec((tm, tn), lambda i, j: (i, j)),
        out_shape=jax.ShapeDtypeStruct((n, dout), res2d.dtype),
        input_output_aliases={3: 0},   # residual buffer reused for the output
        cost_estimate=cost,
        compiler_params=pltpu.CompilerParams(
            dimension_semantics=("parallel", "parallel")),
    )(x2d, w, bias.reshape(1, dout), res2d)


def attention(qkv3d, *, heads):
    B, S, E3 = qkv3d.shape
    E = E3 // 3
    dh = E // heads
    scale = 1.0 / math.sqrt(dh)
    return pl.pallas_call(
        partial(_attn_kernel, heads=heads, dh=dh, scale=scale),
        grid=(B,),
        in_specs=[pl.BlockSpec((1, S, E3), lambda bi: (bi, 0, 0))],
        out_specs=pl.BlockSpec((1, S, E), lambda bi: (bi, 0, 0)),
        out_shape=jax.ShapeDtypeStruct((B, S, E), qkv3d.dtype),
        compiler_params=pltpu.CompilerParams(dimension_semantics=("parallel",)),
    )(qkv3d)


# ---------------------------------------------------------------------------
# Transformer forward
# ---------------------------------------------------------------------------
def transformer_forward(x, params, *, heads):
    # x follows torch MHA batch_first=False: (seq, batch, emb)
    S, B, E = x.shape
    # single batch-major transpose at entry (and back at exit); every per-layer
    # reshape below is a free metadata change (no HBM round-trips).
    xf = jnp.transpose(x, (1, 0, 2)).reshape(B * S, E)
    for p in params:
        # --- attention block: x = x + OutProj(MHA(qkv_eff(LN1(x)))) ---
        qkv = ln_matmul(xf, p["ln1_g"], p["ln1_b"], p["w_qkv"], p["b_qkv"])
        attn = attention(qkv.reshape(B, S, 3 * E), heads=heads)
        x1 = matmul_residual(attn.reshape(B * S, E), p["wo"], p["bo"], xf)
        # --- feed-forward block: x = x + W2(GELU(W1(LN2(x)))) ---
        hmid = ln_matmul(x1, p["ln2_g"], p["ln2_b"], p["w1"], p["b1"],
                         activation="gelu")
        xf = matmul_residual(hmid, p["w2"], p["b2"], x1)
    return jnp.transpose(xf.reshape(B, S, E), (1, 0, 2))


# ---------------------------------------------------------------------------
# Parameter init (synthetic, shapes match the module) + algebraic folding
# ---------------------------------------------------------------------------
def init_params(key, depth, emb, mlp_dim):
    def lin(k, din, dout):
        kw, kb = jax.random.split(k)
        w = jax.random.normal(kw, (din, dout), jnp.float32) * 0.02
        b = jax.random.normal(kb, (dout,), jnp.float32) * 0.02
        return w, b

    params = []
    for d in range(depth):
        keys = jax.random.split(jax.random.fold_in(key, d), 9)
        p = {}
        p["ln1_g"] = jnp.ones((emb,), jnp.float32)
        p["ln1_b"] = jnp.zeros((emb,), jnp.float32)
        p["wq"], p["bq"] = lin(keys[0], emb, emb)
        p["wk"], p["bk"] = lin(keys[1], emb, emb)
        p["wv"], p["bv"] = lin(keys[2], emb, emb)
        p["wiq"], p["biq"] = lin(keys[3], emb, emb)   # MHA in_proj (q part)
        p["wik"], p["bik"] = lin(keys[4], emb, emb)   # MHA in_proj (k part)
        p["wiv"], p["biv"] = lin(keys[5], emb, emb)   # MHA in_proj (v part)
        p["wo"], p["bo"] = lin(keys[6], emb, emb)     # MHA out_proj
        p["ln2_g"] = jnp.ones((emb,), jnp.float32)
        p["ln2_b"] = jnp.zeros((emb,), jnp.float32)
        p["w1"], p["b1"] = lin(keys[7], emb, mlp_dim)
        p["w2"], p["b2"] = lin(keys[8], mlp_dim, emb)
        params.append(p)
    return params


def prepare_params(raw, compute_dtype=COMPUTE_DTYPE):
    """Fold q/k/v Linear + MHA in_proj into one (E, 3E) effective projection and
    cast matmul weights to bf16 (LN params / biases stay f32)."""
    prepared = []
    for p in raw:
        wq = p["wq"] @ p["wiq"]
        bq = p["bq"] @ p["wiq"] + p["biq"]
        wk = p["wk"] @ p["wik"]
        bk = p["bk"] @ p["wik"] + p["bik"]
        wv = p["wv"] @ p["wiv"]
        bv = p["bv"] @ p["wiv"] + p["biv"]
        prepared.append(dict(
            ln1_g=p["ln1_g"], ln1_b=p["ln1_b"],
            w_qkv=jnp.concatenate([wq, wk, wv], axis=1).astype(compute_dtype),
            b_qkv=jnp.concatenate([bq, bk, bv], axis=0),
            wo=p["wo"].astype(compute_dtype), bo=p["bo"],
            ln2_g=p["ln2_g"], ln2_b=p["ln2_b"],
            w1=p["w1"].astype(compute_dtype), b1=p["b1"],
            w2=p["w2"].astype(compute_dtype), b2=p["b2"],
        ))
    return prepared


# ---------------------------------------------------------------------------
if __name__ == "__main__":
    S, B, E = 8, 2, 32          # seq, batch, emb_dim
    HEADS, MLP, DEPTH = 4, 64, 2

    key = jax.random.PRNGKey(0)
    kx, kp = jax.random.split(key)
    x = jax.random.normal(kx, (S, B, E), dtype=jnp.float32)
    params = prepare_params(init_params(kp, DEPTH, E, MLP))

    fwd = jax.jit(partial(transformer_forward, heads=HEADS))
    out = fwd(x, params)
    jax.block_until_ready(out)

    assert out.shape == (S, B, E), out.shape
    assert jnp.all(jnp.isfinite(out))
    print("KERNEL_OK")
</pallas_src>

<mosaic_0001>
module attributes {stable_mosaic.version = 11 : i64} {
  func.func @_ln_matmul_kernel(%arg0: i32, %arg1: i32, %arg2: memref<16x32xf32, #tpu.memory_space<vmem>>, %arg3: memref<1x32xf32, #tpu.memory_space<vmem>>, %arg4: memref<1x32xf32, #tpu.memory_space<vmem>>, %arg5: memref<32x96xbf16, #tpu.memory_space<vmem>>, %arg6: memref<1x96xf32, #tpu.memory_space<vmem>>, %arg7: memref<16x96xf32, #tpu.memory_space<vmem>>) attributes {dimension_semantics = [#tpu.dimension_semantics<parallel>, #tpu.dimension_semantics<parallel>], iteration_bounds = array<i64: 1, 1>, scalar_prefetch = 0 : i64, scratch_operands = 0 : i64, tpu.core_type = #tpu.core_type<tc>, window_params = [{transform_indices = @transform_0, window_bounds = array<i64: 16, 32>}, {pipeline_mode = #tpu.pipeline_mode<synchronous>, transform_indices = @transform_1, window_bounds = array<i64: 1, 32>}, {pipeline_mode = #tpu.pipeline_mode<synchronous>, transform_indices = @transform_2, window_bounds = array<i64: 1, 32>}, {transform_indices = @transform_3, window_bounds = array<i64: 32, 96>}, {transform_indices = @transform_4, window_bounds = array<i64: 1, 96>}, {transform_indices = @transform_5, window_bounds = array<i64: 16, 96>}]} {
    %c0 = arith.constant 0 : index
    %c0_0 = arith.constant 0 : index
    %0 = vector.load %arg2[%c0, %c0_0] : memref<16x32xf32, #tpu.memory_space<vmem>>, vector<16x32xf32>
    %cst = arith.constant dense<0.000000e+00> : vector<16xf32>
    %1 = vector.multi_reduction <add>, %0, %cst [1] : vector<16x32xf32> to vector<16xf32>
    %2 = vector.shape_cast %1 : vector<16xf32> to vector<16x1xf32>
    %cst_1 = arith.constant 3.200000e+01 : f32
    %3 = vector.broadcast %cst_1 : f32 to vector<16x1xf32>
    %4 = arith.divf %2, %3 : vector<16x1xf32>
    %5 = vector.broadcast %4 : vector<16x1xf32> to vector<16x32xf32>
    %6 = arith.subf %0, %5 : vector<16x32xf32>
    %7 = arith.mulf %6, %6 : vector<16x32xf32>
    %cst_2 = arith.constant dense<0.000000e+00> : vector<16xf32>
    %8 = vector.multi_reduction <add>, %7, %cst_2 [1] : vector<16x32xf32> to vector<16xf32>
    %9 = vector.shape_cast %8 : vector<16xf32> to vector<16x1xf32>
    %cst_3 = arith.constant 3.200000e+01 : f32
    %10 = vector.broadcast %cst_3 : f32 to vector<16x1xf32>
    %11 = arith.divf %9, %10 : vector<16x1xf32>
    %12 = vector.broadcast %4 : vector<16x1xf32> to vector<16x32xf32>
    %13 = arith.subf %0, %12 : vector<16x32xf32>
    %cst_4 = arith.constant 9.99999974E-6 : f32
    %14 = vector.broadcast %cst_4 : f32 to vector<16x1xf32>
    %15 = arith.addf %11, %14 : vector<16x1xf32>
    %16 = math.rsqrt %15 : vector<16x1xf32>
    %17 = vector.broadcast %16 : vector<16x1xf32> to vector<16x32xf32>
    %18 = arith.mulf %13, %17 : vector<16x32xf32>
    %c0_5 = arith.constant 0 : index
    %c0_6 = arith.constant 0 : index
    %19 = vector.load %arg3[%c0_5, %c0_6] : memref<1x32xf32, #tpu.memory_space<vmem>>, vector<1x32xf32>
    %20 = vector.broadcast %19 : vector<1x32xf32> to vector<16x32xf32>
    %21 = arith.mulf %18, %20 : vector<16x32xf32>
    %c0_7 = arith.constant 0 : index
    %c0_8 = arith.constant 0 : index
    %22 = vector.load %arg4[%c0_7, %c0_8] : memref<1x32xf32, #tpu.memory_space<vmem>>, vector<1x32xf32>
    %23 = vector.broadcast %22 : vector<1x32xf32> to vector<16x32xf32>
    %24 = arith.addf %21, %23 : vector<16x32xf32>
    %25 = arith.truncf %24 : vector<16x32xf32> to vector<16x32xbf16>
    %c0_9 = arith.constant 0 : index
    %c0_10 = arith.constant 0 : index
    %26 = vector.load %arg5[%c0_9, %c0_10] : memref<32x96xbf16, #tpu.memory_space<vmem>>, vector<32x96xbf16>
    %cst_11 = arith.constant dense<0.000000e+00> : vector<16x96xf32>
    %27 = tpu.matmul %25, %26, %cst_11 {dimension_numbers = #tpu.dot_dimension_numbers<[1], [0], [0], [1], [0, 0, 1, 1], [], []>} : vector<16x32xbf16>, vector<32x96xbf16>, vector<16x96xf32> -> vector<16x96xf32>
    %c0_12 = arith.constant 0 : index
    %c0_13 = arith.constant 0 : index
    %28 = vector.load %arg6[%c0_12, %c0_13] : memref<1x96xf32, #tpu.memory_space<vmem>>, vector<1x96xf32>
    %29 = vector.broadcast %28 : vector<1x96xf32> to vector<16x96xf32>
    %30 = arith.addf %27, %29 : vector<16x96xf32>
    %c0_14 = arith.constant 0 : index
    %c0_15 = arith.constant 0 : index
    %31 = vector.load %arg7[%c0_14, %c0_15] : memref<16x96xf32, #tpu.memory_space<vmem>>, vector<16x96xf32>
    tpu.vector_store %arg7[%c0_14, %c0_15], %30 {strides = array<i32>} : memref<16x96xf32, #tpu.memory_space<vmem>>, vector<16x96xf32>,
    return
  }
  func.func @transform_0(%arg0: i32, %arg1: i32) -> (i32, i32) {
    %c0_i32 = arith.constant 0 : i32
    %c0_i32_0 = arith.constant 0 : i32
    return %arg0, %c0_i32 : i32, i32
  }
  func.func @transform_1(%arg0: i32, %arg1: i32) -> (i32, i32) {
    %c0_i32 = arith.constant 0 : i32
    %c0_i32_0 = arith.constant 0 : i32
    %c0_i32_1 = arith.constant 0 : i32
    return %c0_i32, %c0_i32_0 : i32, i32
  }
  func.func @transform_2(%arg0: i32, %arg1: i32) -> (i32, i32) {
    %c0_i32 = arith.constant 0 : i32
    %c0_i32_0 = arith.constant 0 : i32
    %c0_i32_1 = arith.constant 0 : i32
    return %c0_i32, %c0_i32_0 : i32, i32
  }
  func.func @transform_3(%arg0: i32, %arg1: i32) -> (i32, i32) {
    %c0_i32 = arith.constant 0 : i32
    %c0_i32_0 = arith.constant 0 : i32
    return %c0_i32, %arg1 : i32, i32
  }
  func.func @transform_4(%arg0: i32, %arg1: i32) -> (i32, i32) {
    %c0_i32 = arith.constant 0 : i32
    %c0_i32_0 = arith.constant 0 : i32
    return %c0_i32, %arg1 : i32, i32
  }
  func.func @transform_5(%arg0: i32, %arg1: i32) -> (i32, i32) {
    %c0_i32 = arith.constant 0 : i32
    return %arg0, %arg1 : i32, i32
  }
}

module attributes {stable_mosaic.version = 11 : i64} {
  func.func @_attn_kernel(%arg0: i32, %arg1: memref<1x8x96xf32, #tpu.memory_space<vmem>>, %arg2: memref<1x8x32xf32, #tpu.memory_space<vmem>>) attributes {dimension_semantics = [#tpu.dimension_semantics<parallel>], iteration_bounds = array<i64: 2>, scalar_prefetch = 0 : i64, scratch_operands = 0 : i64, tpu.core_type = #tpu.core_type<tc>, window_params = [{transform_indices = @transform_0, window_bounds = array<i64: 1, 8, 96>}, {transform_indices = @transform_1, window_bounds = array<i64: 1, 8, 32>}]} {
    %c0 = arith.constant 0 : index
    %c0_0 = arith.constant 0 : index
    %c0_1 = arith.constant 0 : index
    %0 = vector.load %arg1[%c0, %c0_0, %c0_1] : memref<1x8x96xf32, #tpu.memory_space<vmem>>, vector<1x8x96xf32>
    %1 = vector.shape_cast %0 : vector<1x8x96xf32> to vector<8x96xf32>
    %2 = vector.extract_strided_slice %1 {offsets = [0, 0], sizes = [8, 8], strides = [1, 1]} : vector<8x96xf32> to vector<8x8xf32>
    %3 = arith.truncf %2 : vector<8x8xf32> to vector<8x8xbf16>
    %4 = vector.extract_strided_slice %1 {offsets = [0, 32], sizes = [8, 8], strides = [1, 1]} : vector<8x96xf32> to vector<8x8xf32>
    %5 = arith.truncf %4 : vector<8x8xf32> to vector<8x8xbf16>
    %6 = vector.extract_strided_slice %1 {offsets = [0, 64], sizes = [8, 8], strides = [1, 1]} : vector<8x96xf32> to vector<8x8xf32>
    %7 = arith.truncf %6 : vector<8x8xf32> to vector<8x8xbf16>
    %cst = arith.constant dense<0.000000e+00> : vector<8x8xf32>
    %8 = tpu.matmul %3, %5, %cst {dimension_numbers = #tpu.dot_dimension_numbers<[1], [1], [0], [0], [0, 0, 1, 0], [], []>} : vector<8x8xbf16>, vector<8x8xbf16>, vector<8x8xf32> -> vector<8x8xf32>
    %cst_2 = arith.constant 0.353553385 : f32
    %9 = vector.broadcast %cst_2 : f32 to vector<8x8xf32>
    %10 = arith.mulf %8, %9 : vector<8x8xf32>
    %cst_3 = arith.constant dense<0xFF800000> : vector<8xf32>
    %11 = vector.multi_reduction <maximumf>, %10, %cst_3 [1] : vector<8x8xf32> to vector<8xf32>
    %12 = vector.shape_cast %11 : vector<8xf32> to vector<8x1xf32>
    %13 = vector.broadcast %12 : vector<8x1xf32> to vector<8x8xf32>
    %14 = arith.subf %10, %13 : vector<8x8xf32>
    %15 = math.exp %14 : vector<8x8xf32>
    %cst_4 = arith.constant dense<0.000000e+00> : vector<8xf32>
    %16 = vector.multi_reduction <add>, %15, %cst_4 [1] : vector<8x8xf32> to vector<8xf32>
    %17 = vector.shape_cast %16 : vector<8xf32> to vector<8x1xf32>
    %18 = tpu.reciprocal %17 {approx = true} : vector<8x1xf32> -> vector<8x1xf32>
    %19 = vector.broadcast %18 : vector<8x1xf32> to vector<8x8xf32>
    %20 = arith.mulf %15, %19 : vector<8x8xf32>
    %21 = arith.truncf %20 : vector<8x8xf32> to vector<8x8xbf16>
    %cst_5 = arith.constant dense<0.000000e+00> : vector<8x8xf32>
    %22 = tpu.matmul %21, %7, %cst_5 {dimension_numbers = #tpu.dot_dimension_numbers<[1], [0], [0], [1], [0, 0, 1, 1], [], []>} : vector<8x8xbf16>, vector<8x8xbf16>, vector<8x8xf32> -> vector<8x8xf32>
    %23 = vector.extract_strided_slice %1 {offsets = [0, 8], sizes = [8, 8], strides = [1, 1]} : vector<8x96xf32> to vector<8x8xf32>
    %24 = arith.truncf %23 : vector<8x8xf32> to vector<8x8xbf16>
    %25 = vector.extract_strided_slice %1 {offsets = [0, 40], sizes = [8, 8], strides = [1, 1]} : vector<8x96xf32> to vector<8x8xf32>
    %26 = arith.truncf %25 : vector<8x8xf32> to vector<8x8xbf16>
    %27 = vector.extract_strided_slice %1 {offsets = [0, 72], sizes = [8, 8], strides = [1, 1]} : vector<8x96xf32> to vector<8x8xf32>
    %28 = arith.truncf %27 : vector<8x8xf32> to vector<8x8xbf16>
    %cst_6 = arith.constant dense<0.000000e+00> : vector<8x8xf32>
    %29 = tpu.matmul %24, %26, %cst_6 {dimension_numbers = #tpu.dot_dimension_numbers<[1], [1], [0], [0], [0, 0, 1, 0], [], []>} : vector<8x8xbf16>, vector<8x8xbf16>, vector<8x8xf32> -> vector<8x8xf32>
    %cst_7 = arith.constant 0.353553385 : f32
    %30 = vector.broadcast %cst_7 : f32 to vector<8x8xf32>
    %31 = arith.mulf %29, %30 : vector<8x8xf32>
    %cst_8 = arith.constant dense<0xFF800000> : vector<8xf32>
    %32 = vector.multi_reduction <maximumf>, %31, %cst_8 [1] : vector<8x8xf32> to vector<8xf32>
    %33 = vector.shape_cast %32 : vector<8xf32> to vector<8x1xf32>
    %34 = vector.broadcast %33 : vector<8x1xf32> to vector<8x8xf32>
    %35 = arith.subf %31, %34 : vector<8x8xf32>
    %36 = math.exp %35 : vector<8x8xf32>
    %cst_9 = arith.constant dense<0.000000e+00> : vector<8xf32>
    %37 = vector.multi_reduction <add>, %36, %cst_9 [1] : vector<8x8xf32> to vector<8xf32>
    %38 = vector.shape_cast %37 : vector<8xf32> to vector<8x1xf32>
    %39 = tpu.reciprocal %38 {approx = true} : vector<8x1xf32> -> vector<8x1xf32>
    %40 = vector.broadcast %39 : vector<8x1xf32> to vector<8x8xf32>
    %41 = arith.mulf %36, %40 : vector<8x8xf32>
    %42 = arith.truncf %41 : vector<8x8xf32> to vector<8x8xbf16>
    %cst_10 = arith.constant dense<0.000000e+00> : vector<8x8xf32>
    %43 = tpu.matmul %42, %28, %cst_10 {dimension_numbers = #tpu.dot_dimension_numbers<[1], [0], [0], [1], [0, 0, 1, 1], [], []>} : vector<8x8xbf16>, vector<8x8xbf16>, vector<8x8xf32> -> vector<8x8xf32>
    %44 = vector.extract_strided_slice %1 {offsets = [0, 16], sizes = [8, 8], strides = [1, 1]} : vector<8x96xf32> to vector<8x8xf32>
    %45 = arith.truncf %44 : vector<8x8xf32> to vector<8x8xbf16>
    %46 = vector.extract_strided_slice %1 {offsets = [0, 48], sizes = [8, 8], strides = [1, 1]} : vector<8x96xf32> to vector<8x8xf32>
    %47 = arith.truncf %46 : vector<8x8xf32> to vector<8x8xbf16>
    %48 = vector.extract_strided_slice %1 {offsets = [0, 80], sizes = [8, 8], strides = [1, 1]} : vector<8x96xf32> to vector<8x8xf32>
    %49 = arith.truncf %48 : vector<8x8xf32> to vector<8x8xbf16>
    %cst_11 = arith.constant dense<0.000000e+00> : vector<8x8xf32>
    %50 = tpu.matmul %45, %47, %cst_11 {dimension_numbers = #tpu.dot_dimension_numbers<[1], [1], [0], [0], [0, 0, 1, 0], [], []>} : vector<8x8xbf16>, vector<8x8xbf16>, vector<8x8xf32> -> vector<8x8xf32>
    %cst_12 = arith.constant 0.353553385 : f32
    %51 = vector.broadcast %cst_12 : f32 to vector<8x8xf32>
    %52 = arith.mulf %50, %51 : vector<8x8xf32>
    %cst_13 = arith.constant dense<0xFF800000> : vector<8xf32>
    %53 = vector.multi_reduction <maximumf>, %52, %cst_13 [1] : vector<8x8xf32> to vector<8xf32>
    %54 = vector.shape_cast %53 : vector<8xf32> to vector<8x1xf32>
    %55 = vector.broadcast %54 : vector<8x1xf32> to vector<8x8xf32>
    %56 = arith.subf %52, %55 : vector<8x8xf32>
    %57 = math.exp %56 : vector<8x8xf32>
    %cst_14 = arith.constant dense<0.000000e+00> : vector<8xf32>
    %58 = vector.multi_reduction <add>, %57, %cst_14 [1] : vector<8x8xf32> to vector<8xf32>
    %59 = vector.shape_cast %58 : vector<8xf32> to vector<8x1xf32>
    %60 = tpu.reciprocal %59 {approx = true} : vector<8x1xf32> -> vector<8x1xf32>
    %61 = vector.broadcast %60 : vector<8x1xf32> to vector<8x8xf32>
    %62 = arith.mulf %57, %61 : vector<8x8xf32>
    %63 = arith.truncf %62 : vector<8x8xf32> to vector<8x8xbf16>
    %cst_15 = arith.constant dense<0.000000e+00> : vector<8x8xf32>
    %64 = tpu.matmul %63, %49, %cst_15 {dimension_numbers = #tpu.dot_dimension_numbers<[1], [0], [0], [1], [0, 0, 1, 1], [], []>} : vector<8x8xbf16>, vector<8x8xbf16>, vector<8x8xf32> -> vector<8x8xf32>
    %65 = vector.extract_strided_slice %1 {offsets = [0, 24], sizes = [8, 8], strides = [1, 1]} : vector<8x96xf32> to vector<8x8xf32>
    %66 = arith.truncf %65 : vector<8x8xf32> to vector<8x8xbf16>
    %67 = vector.extract_strided_slice %1 {offsets = [0, 56], sizes = [8, 8], strides = [1, 1]} : vector<8x96xf32> to vector<8x8xf32>
    %68 = arith.truncf %67 : vector<8x8xf32> to vector<8x8xbf16>
    %69 = vector.extract_strided_slice %1 {offsets = [0, 88], sizes = [8, 8], strides = [1, 1]} : vector<8x96xf32> to vector<8x8xf32>
    %70 = arith.truncf %69 : vector<8x8xf32> to vector<8x8xbf16>
    %cst_16 = arith.constant dense<0.000000e+00> : vector<8x8xf32>
    %71 = tpu.matmul %66, %68, %cst_16 {dimension_numbers = #tpu.dot_dimension_numbers<[1], [1], [0], [0], [0, 0, 1, 0], [], []>} : vector<8x8xbf16>, vector<8x8xbf16>, vector<8x8xf32> -> vector<8x8xf32>
    %cst_17 = arith.constant 0.353553385 : f32
    %72 = vector.broadcast %cst_17 : f32 to vector<8x8xf32>
    %73 = arith.mulf %71, %72 : vector<8x8xf32>
    %cst_18 = arith.constant dense<0xFF800000> : vector<8xf32>
    %74 = vector.multi_reduction <maximumf>, %73, %cst_18 [1] : vector<8x8xf32> to vector<8xf32>
    %75 = vector.shape_cast %74 : vector<8xf32> to vector<8x1xf32>
    %76 = vector.broadcast %75 : vector<8x1xf32> to vector<8x8xf32>
    %77 = arith.subf %73, %76 : vector<8x8xf32>
    %78 = math.exp %77 : vector<8x8xf32>
    %cst_19 = arith.constant dense<0.000000e+00> : vector<8xf32>
    %79 = vector.multi_reduction <add>, %78, %cst_19 [1] : vector<8x8xf32> to vector<8xf32>
    %80 = vector.shape_cast %79 : vector<8xf32> to vector<8x1xf32>
    %81 = tpu.reciprocal %80 {approx = true} : vector<8x1xf32> -> vector<8x1xf32>
    %82 = vector.broadcast %81 : vector<8x1xf32> to vector<8x8xf32>
    %83 = arith.mulf %78, %82 : vector<8x8xf32>
    %84 = arith.truncf %83 : vector<8x8xf32> to vector<8x8xbf16>
    %cst_20 = arith.constant dense<0.000000e+00> : vector<8x8xf32>
    %85 = tpu.matmul %84, %70, %cst_20 {dimension_numbers = #tpu.dot_dimension_numbers<[1], [0], [0], [1], [0, 0, 1, 1], [], []>} : vector<8x8xbf16>, vector<8x8xbf16>, vector<8x8xf32> -> vector<8x8xf32>
    %86 = tpu.concatenate %22, %43, %64, %85 in 1 : vector<8x8xf32>, vector<8x8xf32>, vector<8x8xf32>, vector<8x8xf32> -> vector<8x32xf32>
    %c0_21 = arith.constant 0 : index
    %c0_22 = arith.constant 0 : index
    %c0_23 = arith.constant 0 : index
    %87 = vector.load %arg2[%c0_21, %c0_22, %c0_23] : memref<1x8x32xf32, #tpu.memory_space<vmem>>, vector<1x8x32xf32>
    %88 = vector.shape_cast %87 : vector<1x8x32xf32> to vector<8x32xf32>
    %89 = vector.shape_cast %86 : vector<8x32xf32> to vector<1x8x32xf32>
    tpu.vector_store %arg2[%c0_21, %c0_22, %c0_23], %89 {strides = array<i32>} : memref<1x8x32xf32, #tpu.memory_space<vmem>>, vector<1x8x32xf32>,
    return
  }
  func.func @transform_0(%arg0: i32) -> (i32, i32, i32) {
    %c0_i32 = arith.constant 0 : i32
    %c0_i32_0 = arith.constant 0 : i32
    %c0_i32_1 = arith.constant 0 : i32
    return %arg0, %c0_i32, %c0_i32_0 : i32, i32, i32
  }
  func.func @transform_1(%arg0: i32) -> (i32, i32, i32) {
    %c0_i32 = arith.constant 0 : i32
    %c0_i32_0 = arith.constant 0 : i32
    %c0_i32_1 = arith.constant 0 : i32
    return %arg0, %c0_i32, %c0_i32_0 : i32, i32, i32
  }
}

module attributes {stable_mosaic.version = 11 : i64} {
  func.func @_matmul_residual_kernel(%arg0: i32, %arg1: i32, %arg2: memref<16x32xf32, #tpu.memory_space<vmem>>, %arg3: memref<32x32xbf16, #tpu.memory_space<vmem>>, %arg4: memref<1x32xf32, #tpu.memory_space<vmem>>, %arg5: memref<16x32xf32, #tpu.memory_space<vmem>>, %arg6: memref<16x32xf32, #tpu.memory_space<vmem>>) attributes {dimension_semantics = [#tpu.dimension_semantics<parallel>, #tpu.dimension_semantics<parallel>], iteration_bounds = array<i64: 1, 1>, scalar_prefetch = 0 : i64, scratch_operands = 0 : i64, tpu.core_type = #tpu.core_type<tc>, window_params = [{transform_indices = @transform_0, window_bounds = array<i64: 16, 32>}, {transform_indices = @transform_1, window_bounds = array<i64: 32, 32>}, {transform_indices = @transform_2, window_bounds = array<i64: 1, 32>}, {transform_indices = @transform_3, window_bounds = array<i64: 16, 32>}, {transform_indices = @transform_4, window_bounds = array<i64: 16, 32>}]} {
    %c0 = arith.constant 0 : index
    %c0_0 = arith.constant 0 : index
    %0 = vector.load %arg2[%c0, %c0_0] : memref<16x32xf32, #tpu.memory_space<vmem>>, vector<16x32xf32>
    %1 = arith.truncf %0 : vector<16x32xf32> to vector<16x32xbf16>
    %c0_1 = arith.constant 0 : index
    %c0_2 = arith.constant 0 : index
    %2 = vector.load %arg3[%c0_1, %c0_2] : memref<32x32xbf16, #tpu.memory_space<vmem>>, vector<32x32xbf16>
    %cst = arith.constant dense<0.000000e+00> : vector<16x32xf32>
    %3 = tpu.matmul %1, %2, %cst {dimension_numbers = #tpu.dot_dimension_numbers<[1], [0], [0], [1], [0, 0, 1, 1], [], []>} : vector<16x32xbf16>, vector<32x32xbf16>, vector<16x32xf32> -> vector<16x32xf32>
    %c0_3 = arith.constant 0 : index
    %c0_4 = arith.constant 0 : index
    %4 = vector.load %arg4[%c0_3, %c0_4] : memref<1x32xf32, #tpu.memory_space<vmem>>, vector<1x32xf32>
    %5 = vector.broadcast %4 : vector<1x32xf32> to vector<16x32xf32>
    %6 = arith.addf %3, %5 : vector<16x32xf32>
    %c0_5 = arith.constant 0 : index
    %c0_6 = arith.constant 0 : index
    %7 = vector.load %arg5[%c0_5, %c0_6] : memref<16x32xf32, #tpu.memory_space<vmem>>, vector<16x32xf32>
    %8 = arith.addf %6, %7 : vector<16x32xf32>
    %c0_7 = arith.constant 0 : index
    %c0_8 = arith.constant 0 : index
    %9 = vector.load %arg6[%c0_7, %c0_8] : memref<16x32xf32, #tpu.memory_space<vmem>>, vector<16x32xf32>
    tpu.vector_store %arg6[%c0_7, %c0_8], %8 {strides = array<i32>} : memref<16x32xf32, #tpu.memory_space<vmem>>, vector<16x32xf32>,
    return
  }
  func.func @transform_0(%arg0: i32, %arg1: i32) -> (i32, i32) {
    %c0_i32 = arith.constant 0 : i32
    %c0_i32_0 = arith.constant 0 : i32
    return %arg0, %c0_i32 : i32, i32
  }
  func.func @transform_1(%arg0: i32, %arg1: i32) -> (i32, i32) {
    %c0_i32 = arith.constant 0 : i32
    %c0_i32_0 = arith.constant 0 : i32
    return %c0_i32, %arg1 : i32, i32
  }
  func.func @transform_2(%arg0: i32, %arg1: i32) -> (i32, i32) {
    %c0_i32 = arith.constant 0 : i32
    %c0_i32_0 = arith.constant 0 : i32
    return %c0_i32, %arg1 : i32, i32
  }
  func.func @transform_3(%arg0: i32, %arg1: i32) -> (i32, i32) {
    %c0_i32 = arith.constant 0 : i32
    return %arg0, %arg1 : i32, i32
  }
  func.func @transform_4(%arg0: i32, %arg1: i32) -> (i32, i32) {
    %c0_i32 = arith.constant 0 : i32
    return %arg0, %arg1 : i32, i32
  }
}

module attributes {stable_mosaic.version = 11 : i64} {
  func.func @_ln_matmul_kernel(%arg0: i32, %arg1: i32, %arg2: memref<16x32xf32, #tpu.memory_space<vmem>>, %arg3: memref<1x32xf32, #tpu.memory_space<vmem>>, %arg4: memref<1x32xf32, #tpu.memory_space<vmem>>, %arg5: memref<32x64xbf16, #tpu.memory_space<vmem>>, %arg6: memref<1x64xf32, #tpu.memory_space<vmem>>, %arg7: memref<16x64xf32, #tpu.memory_space<vmem>>) attributes {dimension_semantics = [#tpu.dimension_semantics<parallel>, #tpu.dimension_semantics<parallel>], iteration_bounds = array<i64: 1, 1>, scalar_prefetch = 0 : i64, scratch_operands = 0 : i64, tpu.core_type = #tpu.core_type<tc>, window_params = [{transform_indices = @transform_0, window_bounds = array<i64: 16, 32>}, {pipeline_mode = #tpu.pipeline_mode<synchronous>, transform_indices = @transform_1, window_bounds = array<i64: 1, 32>}, {pipeline_mode = #tpu.pipeline_mode<synchronous>, transform_indices = @transform_2, window_bounds = array<i64: 1, 32>}, {transform_indices = @transform_3, window_bounds = array<i64: 32, 64>}, {transform_indices = @transform_4, window_bounds = array<i64: 1, 64>}, {transform_indices = @transform_5, window_bounds = array<i64: 16, 64>}]} {
    %c0 = arith.constant 0 : index
    %c0_0 = arith.constant 0 : index
    %0 = vector.load %arg2[%c0, %c0_0] : memref<16x32xf32, #tpu.memory_space<vmem>>, vector<16x32xf32>
    %cst = arith.constant dense<0.000000e+00> : vector<16xf32>
    %1 = vector.multi_reduction <add>, %0, %cst [1] : vector<16x32xf32> to vector<16xf32>
    %2 = vector.shape_cast %1 : vector<16xf32> to vector<16x1xf32>
    %cst_1 = arith.constant 3.200000e+01 : f32
    %3 = vector.broadcast %cst_1 : f32 to vector<16x1xf32>
    %4 = arith.divf %2, %3 : vector<16x1xf32>
    %5 = vector.broadcast %4 : vector<16x1xf32> to vector<16x32xf32>
    %6 = arith.subf %0, %5 : vector<16x32xf32>
    %7 = arith.mulf %6, %6 : vector<16x32xf32>
    %cst_2 = arith.constant dense<0.000000e+00> : vector<16xf32>
    %8 = vector.multi_reduction <add>, %7, %cst_2 [1] : vector<16x32xf32> to vector<16xf32>
    %9 = vector.shape_cast %8 : vector<16xf32> to vector<16x1xf32>
    %cst_3 = arith.constant 3.200000e+01 : f32
    %10 = vector.broadcast %cst_3 : f32 to vector<16x1xf32>
    %11 = arith.divf %9, %10 : vector<16x1xf32>
    %12 = vector.broadcast %4 : vector<16x1xf32> to vector<16x32xf32>
    %13 = arith.subf %0, %12 : vector<16x32xf32>
    %cst_4 = arith.constant 9.99999974E-6 : f32
    %14 = vector.broadcast %cst_4 : f32 to vector<16x1xf32>
    %15 = arith.addf %11, %14 : vector<16x1xf32>
    %16 = math.rsqrt %15 : vector<16x1xf32>
    %17 = vector.broadcast %16 : vector<16x1xf32> to vector<16x32xf32>
    %18 = arith.mulf %13, %17 : vector<16x32xf32>
    %c0_5 = arith.constant 0 : index
    %c0_6 = arith.constant 0 : index
    %19 = vector.load %arg3[%c0_5, %c0_6] : memref<1x32xf32, #tpu.memory_space<vmem>>, vector<1x32xf32>
    %20 = vector.broadcast %19 : vector<1x32xf32> to vector<16x32xf32>
    %21 = arith.mulf %18, %20 : vector<16x32xf32>
    %c0_7 = arith.constant 0 : index
    %c0_8 = arith.constant 0 : index
    %22 = vector.load %arg4[%c0_7, %c0_8] : memref<1x32xf32, #tpu.memory_space<vmem>>, vector<1x32xf32>
    %23 = vector.broadcast %22 : vector<1x32xf32> to vector<16x32xf32>
    %24 = arith.addf %21, %23 : vector<16x32xf32>
    %25 = arith.truncf %24 : vector<16x32xf32> to vector<16x32xbf16>
    %c0_9 = arith.constant 0 : index
    %c0_10 = arith.constant 0 : index
    %26 = vector.load %arg5[%c0_9, %c0_10] : memref<32x64xbf16, #tpu.memory_space<vmem>>, vector<32x64xbf16>
    %cst_11 = arith.constant dense<0.000000e+00> : vector<16x64xf32>
    %27 = tpu.matmul %25, %26, %cst_11 {dimension_numbers = #tpu.dot_dimension_numbers<[1], [0], [0], [1], [0, 0, 1, 1], [], []>} : vector<16x32xbf16>, vector<32x64xbf16>, vector<16x64xf32> -> vector<16x64xf32>
    %c0_12 = arith.constant 0 : index
    %c0_13 = arith.constant 0 : index
    %28 = vector.load %arg6[%c0_12, %c0_13] : memref<1x64xf32, #tpu.memory_space<vmem>>, vector<1x64xf32>
    %29 = vector.broadcast %28 : vector<1x64xf32> to vector<16x64xf32>
    %30 = arith.addf %27, %29 : vector<16x64xf32>
    %cst_14 = arith.constant 5.000000e-01 : f32
    %31 = vector.broadcast %cst_14 : f32 to vector<16x64xf32>
    %32 = arith.mulf %31, %30 : vector<16x64xf32>
    %cst_15 = arith.constant 0.707106769 : f32
    %33 = vector.broadcast %cst_15 : f32 to vector<16x64xf32>
    %34 = arith.mulf %30, %33 : vector<16x64xf32>
    %35 = math.erf %34 : vector<16x64xf32>
    %cst_16 = arith.constant 1.000000e+00 : f32
    %36 = vector.broadcast %cst_16 : f32 to vector<16x64xf32>
    %37 = arith.addf %36, %35 : vector<16x64xf32>
    %38 = arith.mulf %32, %37 : vector<16x64xf32>
    %c0_17 = arith.constant 0 : index
    %c0_18 = arith.constant 0 : index
    %39 = vector.load %arg7[%c0_17, %c0_18] : memref<16x64xf32, #tpu.memory_space<vmem>>, vector<16x64xf32>
    tpu.vector_store %arg7[%c0_17, %c0_18], %38 {strides = array<i32>} : memref<16x64xf32, #tpu.memory_space<vmem>>, vector<16x64xf32>,
    return
  }
  func.func @transform_0(%arg0: i32, %arg1: i32) -> (i32, i32) {
    %c0_i32 = arith.constant 0 : i32
    %c0_i32_0 = arith.constant 0 : i32
    return %arg0, %c0_i32 : i32, i32
  }
  func.func @transform_1(%arg0: i32, %arg1: i32) -> (i32, i32) {
    %c0_i32 = arith.constant 0 : i32
    %c0_i32_0 = arith.constant 0 : i32
    %c0_i32_1 = arith.constant 0 : i32
    return %c0_i32, %c0_i32_0 : i32, i32
  }
  func.func @transform_2(%arg0: i32, %arg1: i32) -> (i32, i32) {
    %c0_i32 = arith.constant 0 : i32
    %c0_i32_0 = arith.constant 0 : i32
    %c0_i32_1 = arith.constant 0 : i32
    return %c0_i32, %c0_i32_0 : i32, i32
  }
  func.func @transform_3(%arg0: i32, %arg1: i32) -> (i32, i32) {
    %c0_i32 = arith.constant 0 : i32
    %c0_i32_0 = arith.constant 0 : i32
    return %c0_i32, %arg1 : i32, i32
  }
  func.func @transform_4(%arg0: i32, %arg1: i32) -> (i32, i32) {
    %c0_i32 = arith.constant 0 : i32
    %c0_i32_0 = arith.constant 0 : i32
    return %c0_i32, %arg1 : i32, i32
  }
  func.func @transform_5(%arg0: i32, %arg1: i32) -> (i32, i32) {
    %c0_i32 = arith.constant 0 : i32
    return %arg0, %arg1 : i32, i32
  }
}

module attributes {stable_mosaic.version = 11 : i64} {
  func.func @_matmul_residual_kernel(%arg0: i32, %arg1: i32, %arg2: memref<16x64xf32, #tpu.memory_space<vmem>>, %arg3: memref<64x32xbf16, #tpu.memory_space<vmem>>, %arg4: memref<1x32xf32, #tpu.memory_space<vmem>>, %arg5: memref<16x32xf32, #tpu.memory_space<vmem>>, %arg6: memref<16x32xf32, #tpu.memory_space<vmem>>) attributes {dimension_semantics = [#tpu.dimension_semantics<parallel>, #tpu.dimension_semantics<parallel>], iteration_bounds = array<i64: 1, 1>, scalar_prefetch = 0 : i64, scratch_operands = 0 : i64, tpu.core_type = #tpu.core_type<tc>, window_params = [{transform_indices = @transform_0, window_bounds = array<i64: 16, 64>}, {transform_indices = @transform_1, window_bounds = array<i64: 64, 32>}, {transform_indices = @transform_2, window_bounds = array<i64: 1, 32>}, {transform_indices = @transform_3, window_bounds = array<i64: 16, 32>}, {transform_indices = @transform_4, window_bounds = array<i64: 16, 32>}]} {
    %c0 = arith.constant 0 : index
    %c0_0 = arith.constant 0 : index
    %0 = vector.load %arg2[%c0, %c0_0] : memref<16x64xf32, #tpu.memory_space<vmem>>, vector<16x64xf32>
    %1 = arith.truncf %0 : vector<16x64xf32> to vector<16x64xbf16>
    %c0_1 = arith.constant 0 : index
    %c0_2 = arith.constant 0 : index
    %2 = vector.load %arg3[%c0_1, %c0_2] : memref<64x32xbf16, #tpu.memory_space<vmem>>, vector<64x32xbf16>
    %cst = arith.constant dense<0.000000e+00> : vector<16x32xf32>
    %3 = tpu.matmul %1, %2, %cst {dimension_numbers = #tpu.dot_dimension_numbers<[1], [0], [0], [1], [0, 0, 1, 1], [], []>} : vector<16x64xbf16>, vector<64x32xbf16>, vector<16x32xf32> -> vector<16x32xf32>
    %c0_3 = arith.constant 0 : index
    %c0_4 = arith.constant 0 : index
    %4 = vector.load %arg4[%c0_3, %c0_4] : memref<1x32xf32, #tpu.memory_space<vmem>>, vector<1x32xf32>
    %5 = vector.broadcast %4 : vector<1x32xf32> to vector<16x32xf32>
    %6 = arith.addf %3, %5 : vector<16x32xf32>
    %c0_5 = arith.constant 0 : index
    %c0_6 = arith.constant 0 : index
    %7 = vector.load %arg5[%c0_5, %c0_6] : memref<16x32xf32, #tpu.memory_space<vmem>>, vector<16x32xf32>
    %8 = arith.addf %6, %7 : vector<16x32xf32>
    %c0_7 = arith.constant 0 : index
    %c0_8 = arith.constant 0 : index
    %9 = vector.load %arg6[%c0_7, %c0_8] : memref<16x32xf32, #tpu.memory_space<vmem>>, vector<16x32xf32>
    tpu.vector_store %arg6[%c0_7, %c0_8], %8 {strides = array<i32>} : memref<16x32xf32, #tpu.memory_space<vmem>>, vector<16x32xf32>,
    return
  }
  func.func @transform_0(%arg0: i32, %arg1: i32) -> (i32, i32) {
    %c0_i32 = arith.constant 0 : i32
    %c0_i32_0 = arith.constant 0 : i32
    return %arg0, %c0_i32 : i32, i32
  }
  func.func @transform_1(%arg0: i32, %arg1: i32) -> (i32, i32) {
    %c0_i32 = arith.constant 0 : i32
    %c0_i32_0 = arith.constant 0 : i32
    return %c0_i32, %arg1 : i32, i32
  }
  func.func @transform_2(%arg0: i32, %arg1: i32) -> (i32, i32) {
    %c0_i32 = arith.constant 0 : i32
    %c0_i32_0 = arith.constant 0 : i32
    return %c0_i32, %arg1 : i32, i32
  }
  func.func @transform_3(%arg0: i32, %arg1: i32) -> (i32, i32) {
    %c0_i32 = arith.constant 0 : i32
    return %arg0, %arg1 : i32, i32
  }
  func.func @transform_4(%arg0: i32, %arg1: i32) -> (i32, i32) {
    %c0_i32 = arith.constant 0 : i32
    return %arg0, %arg1 : i32, i32
  }
}

</mosaic_0001>

<llo_original>
// kernel: transformer_forward.10
$region0: #{transformer_forward.10}
  #allocation0 [shape = 'u32[]', space=smem, size = 0x4, offset = 0x4, fixed_abs, tag = 'smem constant byte address 0x4 - core index']
  #allocation1 [shape = 'u32[72,128]{1,0:T(1,128)}', space=vmem, size = 0x9000, scoped, tag = 'internal scratch']
  %s0 = inlined_call_operand.vmem [shape: f32[16,32], index: 0, kind: input, shape index: {}]
  %s1 = inlined_call_operand.vmem [shape: f32[1,32], index: 1, kind: input, shape index: {}]
  %s2 = inlined_call_operand.vmem [shape: f32[1,32], index: 2, kind: input, shape index: {}]
  %s3 = inlined_call_operand.vmem [shape: bf16[32,96], index: 3, kind: input, shape index: {}]
  %s4 = inlined_call_operand.vmem [shape: f32[1,96], index: 4, kind: input, shape index: {}]
  %s5 = inlined_call_operand.vmem [shape: f32[16,96], index: 5, kind: output, shape index: {}]
  %s6 = sld [smem:[#allocation0]]
  $region30: #{transformer_forward.10} parent=0
    _
  %s8 = ssub.s32 1, %s6
  %s9 = scalar_select 0, %s8, %s6
  // Predicated region
  $region2: #{transformer_forward.10} parent=0 // pred_check
    _
  $region3: #{transformer_forward.10} parent=0 // pred_check_branch
    %11 = sbr.rel (0) target = $region5
  $region4: #{transformer_forward.10} parent=0 // pred_region
    _
  $region5: #{transformer_forward.10} parent=0 // pred_fallthru
    _
  // Predicated region
  $region6: #{transformer_forward.10} parent=0 // pred_check
    _
  $region7: #{transformer_forward.10} parent=0 // pred_check_branch
    %13 = sbr.rel (0) target = $region9
  $region8: #{transformer_forward.10} parent=0 // pred_region
    _
  $region9: #{transformer_forward.10} parent=0 // pred_fallthru
    _
  // Predicated region
  $region10: #{transformer_forward.10} parent=0 // pred_check
    _
  $region11: #{transformer_forward.10} parent=0 // pred_check_branch
    %15 = sbr.rel (0) target = $region13
  $region12: #{transformer_forward.10} parent=0 // pred_region
    _
  $region13: #{transformer_forward.10} parent=0 // pred_fallthru
    _
  // Predicated region
  $region14: #{transformer_forward.10} parent=0 // pred_check
    _
  $region15: #{transformer_forward.10} parent=0 // pred_check_branch
    %17 = sbr.rel (0) target = $region17
  $region16: #{transformer_forward.10} parent=0 // pred_region
    _
  $region17: #{transformer_forward.10} parent=0 // pred_fallthru
    _
  // Predicated region
  $region18: #{transformer_forward.10} parent=0 // pred_check
    _
  $region19: #{transformer_forward.10} parent=0 // pred_check_branch
    %19 = sbr.rel (0) target = $region21
  $region20: #{transformer_forward.10} parent=0 // pred_region
    _
  $region21: #{transformer_forward.10} parent=0 // pred_fallthru
    _
  %v21 = vld [vmem:[%s0] sm:$0xff]
  %v22 = vld [vmem:[%s0 + $0x8] sm:$0xff]
  %vm23 = vcmask 261120
  %v24 = vsel %vm23, %v21, 0.0
  %25 = vadd.xlane.f32.xlu0 %v24
  %v26 = vpop.xlane.xlu0 %25
  %v27 = vsel %vm23, %v22, 0.0
  %28 = vadd.xlane.f32.xlu0 %v27
  %v29 = vpop.xlane.xlu0 %28
  %v30 = vrcp.pop 32.0
  %v31 = vmul.f32 32.0, %v30
  %v32 = vsub.f32 1.0, %v31
  %v33 = vmul.f32 %v30, %v32
  %v34 = vadd.f32 %v30, %v33
  %vm35 = vweird.f32 %v30
  %v36 = vsel %vm35, %v30, %v34
  %v37 = vmul.f32 %v26, %v36
  %v38 = vmul.f32 %v29, %v36
  %v39 = vsub.f32 %v21, %v37
  %v40 = vsub.f32 %v22, %v38
  %v41 = vmul.f32 %v39, %v39
  %v42 = vmul.f32 %v40, %v40
  %v43 = vsel %vm23, %v41, 0.0
  %44 = vadd.xlane.f32.xlu0 %v43
  %v45 = vpop.xlane.xlu0 %44
  %v46 = vsel %vm23, %v42, 0.0
  %47 = vadd.xlane.f32.xlu0 %v46
  %v48 = vpop.xlane.xlu0 %47
  %v49 = vmul.f32 %v45, %v36
  %v50 = vmul.f32 %v48, %v36
  %v51 = vadd.f32 %v49, 1e-05
  %v52 = vadd.f32 %v50, 1e-05
  %v53 = vrsqrt.pop %v51
  %v54 = vmul.f32 %v53, %v51
  %v55 = vmul.f32 %v54, %v53
  %v56 = vmul.f32 0.5, %v55
  %v57 = vsub.f32 1.5, %v56
  %v58 = vmul.f32 %v53, %v57
  %vm59 = vweird.f32 %v51
  %vm60 = vweird.f32 %v53
  %vm61 = vmor %vm59, %vm60
  %v62 = vsel %vm61, %v53, %v58
  %v63 = vrsqrt.pop %v52
  %v64 = vmul.f32 %v63, %v52
  %v65 = vmul.f32 %v64, %v63
  %v66 = vmul.f32 0.5, %v65
  %v67 = vsub.f32 1.5, %v66
  %v68 = vmul.f32 %v63, %v67
  %vm69 = vweird.f32 %v52
  %vm70 = vweird.f32 %v63
  %vm71 = vmor %vm69, %vm70
  %v72 = vsel %vm71, %v63, %v68
  %v73 = vmul.f32 %v39, %v62
  %v74 = vmul.f32 %v40, %v72
  %v75 = vld [vmem:[%s1] sm:$0x1]
  %v77 = vperm.slane %v75, 0
  %v79 = vmul.f32 %v73, %v77
  %v80 = vmul.f32 %v74, %v77
  %v81 = vld [vmem:[%s2] sm:$0x1]
  %v83 = vperm.slane %v81, 0
  %v85 = vadd.f32 %v79, %v83
  %v86 = vadd.f32 %v80, %v83
  %v87 = vpack.c.bf16 %v86, %v85
  %v88 = vld [vmem:[%s3] sm:$0xf]
  %v89 = vld [vmem:[%s3 + $0x4] sm:$0xf]
  %v90 = vld [vmem:[%s3 + $0x8] sm:$0xf]
  %v91 = vld [vmem:[%s3 + $0xc] sm:$0xf]
  %v92 = vld [vmem:[%s4] sm:$0x1]
  %v94 = vperm.slane %v92, 0
  %v100 = vunpack.c.l.b16 %v88
  %v101 = vunpack.c.l.b16 %v89
  %v102 = vunpack.c.l.b16 %v90
  %v103 = vunpack.c.l.b16 %v91
  %v104 = vpack.c.b16 %v101, %v100
  %v105 = vpack.c.b16 %v103, %v102
  %v109 = vsel %vm23, %v87, 0
  %111 = vmatpush.bf16.msra.mxu0 0
  %112 = vmatpush.bf16.msra.mxu0 0
  %113 = vmatpush.bf16.msra.mxu0 0
  %114 = vmatpush.bf16.msra.mxu0 0
  %115 = vmatpush.bf16.msra.mxu0 0
  %116 = vmatpush.bf16.msra.mxu0 0
  %117 = vmatpush.bf16.msra.mxu0 %v105
  %118 = vmatpush.bf16.msra.mxu0 %v104
  %119 = vmatmul.bf16.gmra.mxu0 %v109
  %v120 = vpop.f32.mrf.mxu0
  %v121 = vadd.f32 %v94, %v120
  %v122 = vpop.f32.mrf.mxu0
  %v123 = vadd.f32 %v94, %v122
  %124 = vdwg.mxu0
  %vm125 = vcmask 785408
  %126 = vst.msk [vmem:[%s5] sm:$0xff] %vm125, %v121
  %127 = vst.msk [vmem:[%s5 + $0x8] sm:$0xff] %vm125, %v123
  // Predicated region
  $region22: #{transformer_forward.10} parent=0 // pred_check
    _
  $region23: #{transformer_forward.10} parent=0 // pred_check_branch
    %129 = sbr.rel (0) target = $region25
  $region24: #{transformer_forward.10} parent=0 // pred_region
    _
  $region25: #{transformer_forward.10} parent=0 // pred_fallthru
    _
  // Predicated region
  $region26: #{transformer_forward.10} parent=0 // pred_check
    _
  $region27: #{transformer_forward.10} parent=0 // pred_check_branch
    %131 = sbr.rel (0) target = $region29
  $region28: #{transformer_forward.10} parent=0 // pred_region
    _
  $region29: #{transformer_forward.10} parent=0 // pred_fallthru
    _

// kernel: transformer_forward.12
$region0: #{transformer_forward.12}
  #allocation0 [shape = 'u32[]', space=smem, size = 0x4, offset = 0x4, fixed_abs, tag = 'smem constant byte address 0x4 - core index']
  #allocation1 [shape = 'u32[72,128]{1,0:T(1,128)}', space=vmem, size = 0x9000, scoped, tag = 'internal scratch']
  %s0 = inlined_call_operand.vmem [shape: f32[16,32], index: 0, kind: input, shape index: {}]
  %s1 = inlined_call_operand.vmem [shape: bf16[32,32], index: 1, kind: input, shape index: {}]
  %s2 = inlined_call_operand.vmem [shape: f32[1,32], index: 2, kind: input, shape index: {}]
  %s3 = inlined_call_operand.vmem [shape: f32[16,32], index: 3, kind: input, shape index: {}, may-alias: {3,4}]
  %s4 = inlined_call_operand.vmem [shape: f32[16,32], index: 4, kind: output, shape index: {}, may-alias: {3,4}]
  %s5 = sld [smem:[#allocation0]]
  $region26: #{transformer_forward.12} parent=0
    _
  %s7 = ssub.s32 1, %s5
  %s8 = scalar_select 0, %s7, %s5
  // Predicated region
  $region2: #{transformer_forward.12} parent=0 // pred_check
    _
  $region3: #{transformer_forward.12} parent=0 // pred_check_branch
    %10 = sbr.rel (0) target = $region5
  $region4: #{transformer_forward.12} parent=0 // pred_region
    _
  $region5: #{transformer_forward.12} parent=0 // pred_fallthru
    _
  // Predicated region
  $region6: #{transformer_forward.12} parent=0 // pred_check
    _
  $region7: #{transformer_forward.12} parent=0 // pred_check_branch
    %12 = sbr.rel (0) target = $region9
  $region8: #{transformer_forward.12} parent=0 // pred_region
    _
  $region9: #{transformer_forward.12} parent=0 // pred_fallthru
    _
  // Predicated region
  $region10: #{transformer_forward.12} parent=0 // pred_check
    _
  $region11: #{transformer_forward.12} parent=0 // pred_check_branch
    %14 = sbr.rel (0) target = $region13
  $region12: #{transformer_forward.12} parent=0 // pred_region
    _
  $region13: #{transformer_forward.12} parent=0 // pred_fallthru
    _
  // Predicated region
  $region14: #{transformer_forward.12} parent=0 // pred_check
    _
  $region15: #{transformer_forward.12} parent=0 // pred_check_branch
    %16 = sbr.rel (0) target = $region17
  $region16: #{transformer_forward.12} parent=0 // pred_region
    _
  $region17: #{transformer_forward.12} parent=0 // pred_fallthru
    _
  %v18 = vld [vmem:[%s0] sm:$0xff]
  %v19 = vld [vmem:[%s0 + $0x8] sm:$0xff]
  %v20 = vpack.c.bf16 %v19, %v18
  %v21 = vld [vmem:[%s1] sm:$0xf]
  %v22 = vld [vmem:[%s1 + $0x4] sm:$0xf]
  %v23 = vld [vmem:[%s1 + $0x8] sm:$0xf]
  %v24 = vld [vmem:[%s1 + $0xc] sm:$0xf]
  %v25 = vld [vmem:[%s2] sm:$0x1]
  %v27 = vperm.slane %v25, 0
  %v33 = vunpack.c.l.b16 %v21
  %v34 = vunpack.c.l.b16 %v22
  %v35 = vunpack.c.l.b16 %v23
  %v36 = vunpack.c.l.b16 %v24
  %v37 = vpack.c.b16 %v34, %v33
  %v38 = vpack.c.b16 %v36, %v35
  %vm41 = vcmask 261120
  %v43 = vsel %vm41, %v20, 0
  %45 = vmatpush.bf16.msra.mxu0 0
  %46 = vmatpush.bf16.msra.mxu0 0
  %47 = vmatpush.bf16.msra.mxu0 0
  %48 = vmatpush.bf16.msra.mxu0 0
  %49 = vmatpush.bf16.msra.mxu0 0
  %50 = vmatpush.bf16.msra.mxu0 0
  %51 = vmatpush.bf16.msra.mxu0 %v38
  %52 = vmatpush.bf16.msra.mxu0 %v37
  %53 = vmatmul.bf16.gmra.mxu0 %v43
  %v54 = vpop.f32.mrf.mxu0
  %v55 = vadd.f32 %v27, %v54
  %v56 = vpop.f32.mrf.mxu0
  %v57 = vadd.f32 %v27, %v56
  %58 = vdwg.mxu0
  %v59 = vld [vmem:[%s3] sm:$0xff]
  %v60 = vld [vmem:[%s3 + $0x8] sm:$0xff]
  %v61 = vadd.f32 %v55, %v59
  %v62 = vadd.f32 %v57, %v60
  %63 = vst.msk [vmem:[%s4] sm:$0xff] %vm41, %v61
  %64 = vst.msk [vmem:[%s4 + $0x8] sm:$0xff] %vm41, %v62
  // Predicated region
  $region18: #{transformer_forward.12} parent=0 // pred_check
    _
  $region19: #{transformer_forward.12} parent=0 // pred_check_branch
    %66 = sbr.rel (0) target = $region21
  $region20: #{transformer_forward.12} parent=0 // pred_region
    _
  $region21: #{transformer_forward.12} parent=0 // pred_fallthru
    _
  // Predicated region
  $region22: #{transformer_forward.12} parent=0 // pred_check
    _
  $region23: #{transformer_forward.12} parent=0 // pred_check_branch
    %68 = sbr.rel (0) target = $region25
  $region24: #{transformer_forward.12} parent=0 // pred_region
    _
  $region25: #{transformer_forward.12} parent=0 // pred_fallthru
    _

// kernel: transformer_forward.11
$region0: #{transformer_forward.11}
  #allocation0 [shape = 'u32[]', space=smem, size = 0x4, offset = 0x4, fixed_abs, tag = 'smem constant byte address 0x4 - core index']
  #allocation1 [shape = 'u32[72,128]{1,0:T(1,128)}', space=vmem, size = 0x9000, scoped, tag = 'internal scratch']
  %s0 = inlined_call_operand.vmem [shape: f32[2,8,96], index: 0, kind: input, shape index: {}]
  %s1 = inlined_call_operand.vmem [shape: f32[2,8,32], index: 1, kind: output, shape index: {}]
  %s2 = sld [smem:[#allocation0]]
  $region37: #{transformer_forward.11} parent=0
    _
  %s4 = ssub.s32 1, %s2
  %s5 = scalar_select 0, %s4, %s2
  loop: start=0, step=1, limit=4
  $region2: #{transformer_forward.11} parent=0 // loop_pre_header
    _
  $region3: #{transformer_forward.11} parent=0 // loop_header
    %s7 = sphi 0, %s11
    %p8 = scmp.ge.s32.totalorder %s7, 4
    %s17 = sphi 0, %s19
    %s20 = sphi 0, %s17
    %s21 = sphi 0, %s20
    %s37 = sphi 0, %s21
    %s43 = sphi 0, %s45
    %s46 = sphi 0, %s43
    %s47 = sphi 0, %s46
    %s63 = sphi 0, %s47
  $region4: #{transformer_forward.11} parent=0 // loop_header_branch
    %10 = sbr.rel (%p8) target = $region8
  $region5: #{transformer_forward.11} parent=0 // loop_body
    %s12 = ssub.s32 %s7, 1
    %s13 = ssub.s32 %s7, 2
    %s14 = sadd.s32 %s7, 1
    %s15 = ssub.s32 %s7, %s14
    %p16 = scmp.eq.s32.totalorder %s15, 0
    %s18 = sadd.s32 %s17, 1
    %s19 = scalar_select %p16, %s17, %s18
    %p22 = pneg %p16
    %p23 = scmp.eq.s32.totalorder %s7, 1
    %p24 = por %p22, %p23
    %p25 = scmp.ne.s32.totalorder %s17, %s20
    %p26 = scmp.eq.s32.totalorder %s7, 0
    %p27 = por %p25, %p26
    %p28 = scmp.ne.s32.totalorder %s17, %s20
    %p29 = scmp.eq.s32.totalorder %s12, 1
    %p30 = por %p28, %p29
    %p31 = scmp.ne.s32.totalorder %s20, %s21
    %p32 = scmp.eq.s32.totalorder %s12, 0
    %p33 = por %p31, %p32
    %p34 = scmp.ne.s32.totalorder %s20, %s21
    %p35 = scmp.eq.s32.totalorder %s13, 1
    %p36 = por %p34, %p35
    %p38 = scmp.ne.s32.totalorder %s21, %s37
    %p39 = scmp.eq.s32.totalorder %s13, 0
    %p40 = por %p38, %p39
    %s41 = ssub.s32 %s7, %s14
    %p42 = scmp.eq.s32.totalorder %s41, 0
    %s44 = sadd.s32 %s43, 1
    %s45 = scalar_select %p42, %s43, %s44
    %p48 = pneg %p42
    %p49 = scmp.eq.s32.totalorder %s7, 1
    %p50 = por %p48, %p49
    %p51 = scmp.ne.s32.totalorder %s43, %s46
    %p52 = scmp.eq.s32.totalorder %s7, 0
    %p53 = por %p51, %p52
    %p54 = scmp.ne.s32.totalorder %s43, %s46
    %p55 = scmp.eq.s32.totalorder %s12, 1
    %p56 = por %p54, %p55
    %p57 = scmp.ne.s32.totalorder %s46, %s47
    %p58 = scmp.eq.s32.totalorder %s12, 0
    %p59 = por %p57, %p58
    %p60 = scmp.ne.s32.totalorder %s46, %s47
    %p61 = scmp.eq.s32.totalorder %s13, 1
    %p62 = por %p60, %p61
    %p64 = scmp.ne.s32.totalorder %s47, %s63
    %p65 = scmp.eq.s32.totalorder %s13, 0
    %p66 = por %p64, %p65
    %p67 = scmp.le.s32.totalorder 1, %s7
    %p68 = scmp.lt.s32.totalorder %s7, 3
    %p69 = pnand %p67, %p68
    %p70 = pneg %p69
    // Predicated region
    $region9: #{transformer_forward.11} parent=5 // pred_check
      _
    $region10: #{transformer_forward.11} parent=5 // pred_check_branch
      %72 = sbr.rel (%p69) target = $region12
    $region11: #{transformer_forward.11} parent=5 // pred_region
      %s73 = ssub.s32 %s7, 1
    $region12: #{transformer_forward.11} parent=5 // pred_fallthru
      _
    %p74 = scmp.lt.s32.totalorder %s7, 2
    // Predicated region
    $region13: #{transformer_forward.11} parent=5 // pred_check
      %p75 = pneg %p74
    $region14: #{transformer_forward.11} parent=5 // pred_check_branch
      %77 = sbr.rel (%p75) target = $region16
    $region15: #{transformer_forward.11} parent=5 // pred_region
      // Predicated region
      $region17: #{transformer_forward.11} parent=15 // pred_check
        %p78 = pneg %p27
      $region18: #{transformer_forward.11} parent=15 // pred_check_branch
        %80 = sbr.rel (%p78) target = $region20
      $region19: #{transformer_forward.11} parent=15 // pred_region
        %p81 = scmp.lt.s32.totalorder %s7, 1
        %s82 = scalar_select %p81, %s7, 1
        %s83 = smul.addr %s82, 8
        %s84 = scalar_lea.vmem %s0, %s83
      $region20: #{transformer_forward.11} parent=15 // pred_fallthru
        _
    $region16: #{transformer_forward.11} parent=5 // pred_fallthru
      _
    %p85 = scmp.le.s32.totalorder 1, %s7
    %p86 = scmp.lt.s32.totalorder %s7, 3
    %p87 = pnand %p85, %p86
    %p88 = pneg %p87
    // Predicated region
    $region21: #{transformer_forward.11} parent=5 // pred_check
      _
    $region22: #{transformer_forward.11} parent=5 // pred_check_branch
      %90 = sbr.rel (%p87) target = $region24
    $region23: #{transformer_forward.11} parent=5 // pred_region
      %s91 = ssub.s32 %s7, 1
      %p92 = scmp.lt.s32.totalorder %s12, 1
      %s93 = scalar_select %p92, %s12, 1
      %s94 = smul.addr %s93, 8
      %s95 = scalar_lea.vmem %s0, %s94
      %p96 = pneg %p33
      %p97 = pneg %p30
      %p98 = pneg %p59
      %p99 = pneg %p56
      %p100 = scmp.lt.s32.totalorder %s12, 1
      %s101 = scalar_select %p100, %s12, 1
      %s102 = smul.addr %s101, 8
      %s103 = scalar_lea.vmem %s1, %s102
      %p104 = scmp.lt.s32.totalorder %s12, 1
      %s105 = scalar_select %p104, %s12, 1
      %s106 = smul.addr %s105, 8
      %s107 = scalar_lea.vmem %s0, %s106
      %p108 = scmp.lt.s32.totalorder %s12, 1
      %s109 = scalar_select %p108, %s12, 1
      %s110 = smul.addr %s109, 8
      %s111 = scalar_lea.vmem %s1, %s110
      %v113 = vld [vmem:[%s107] sm:$0xff]
      %v114 = vpack.c.bf16 %v113, %v113
      %116 = vrot.lane.b32.xlu0 %v114, 96
      %v117 = vpop.permute.xlu0 %116
      %vm118 = vcmask 64512
      %v120 = vsel %vm118, %v114, 0
      %v123 = vsel %vm118, %v117, 0
      %125 = vmatpush.bf16.xpose.msra.mxu0 0
      %126 = vmatpush.bf16.xpose.msra.mxu0 0
      %127 = vmatpush.bf16.xpose.msra.mxu0 0
      %128 = vmatpush.bf16.xpose.msra.mxu0 0
      %129 = vmatpush.bf16.xpose.msra.mxu0 0
      %130 = vmatpush.bf16.xpose.msra.mxu0 0
      %131 = vmatpush.bf16.xpose.msra.mxu0 0
      %132 = vmatpush.bf16.xpose.msra.mxu0 %v123
      %133 = vmatmul.bf16.gmra.mxu0 %v120
      %v134 = vpop.f32.mrf.mxu0
      %v135 = vadd.f32 0.0, %v134
      %v136 = vpop.f32.mrf.mxu0
      %137 = vdwg.mxu0
      %v138 = vmul.f32 %v135, 0.35355338
      %v139 = vsel %vm118, %v138, -inf
      %140 = vmax.xlane.f32.xlu0 %v139
      %v141 = vpop.xlane.xlu0 %140
      %v142 = vsub.f32 %v138, %v141
      %v143 = vmul.f32 %v142, 1.442695
      %v144 = vpow.pop %v143
      %v145 = vsel %vm118, %v144, 0.0
      %146 = vadd.xlane.f32.xlu0 %v145
      %v147 = vpop.xlane.xlu0 %146
      %v148 = vrcp.pop %v147
      %v149 = vmul.f32 %v144, %v148
      %v150 = vpack.c.bf16 %v149, %v149
      %151 = vrot.lane.b32.xlu0 %v114, 64
      %v152 = vpop.permute.xlu0 %151
      %v154 = vsel %vm118, %v150, 0
      %vm156 = vcmask 1043456
      %v158 = vsel %vm156, %v152, 0
      %160 = vmatpush.bf16.msra.mxu0 0
      %161 = vmatpush.bf16.msra.mxu0 0
      %162 = vmatpush.bf16.msra.mxu0 0
      %163 = vmatpush.bf16.msra.mxu0 0
      %164 = vmatpush.bf16.msra.mxu0 0
      %165 = vmatpush.bf16.msra.mxu0 0
      %166 = vmatpush.bf16.msra.mxu0 0
      %167 = vmatpush.bf16.msra.mxu0 %v158
      %168 = vmatmul.bf16.gmra.mxu0 %v154
      %v169 = vpop.f32.mrf.mxu0
      %v170 = vadd.f32 0.0, %v169
      %v171 = vpop.f32.mrf.mxu0
      %172 = vdwg.mxu0
      %173 = vrot.lane.b32.xlu0 %v114, 120
      %v174 = vpop.permute.xlu0 %173
      %175 = vrot.lane.b32.xlu0 %v114, 88
      %v176 = vpop.permute.xlu0 %175
      %v178 = vsel %vm118, %v174, 0
      %v181 = vsel %vm118, %v176, 0
      %183 = vmatpush.bf16.xpose.msra.mxu0 0
      %184 = vmatpush.bf16.xpose.msra.mxu0 0
      %185 = vmatpush.bf16.xpose.msra.mxu0 0
      %186 = vmatpush.bf16.xpose.msra.mxu0 0
      %187 = vmatpush.bf16.xpose.msra.mxu0 0
      %188 = vmatpush.bf16.xpose.msra.mxu0 0
      %189 = vmatpush.bf16.xpose.msra.mxu0 0
      %190 = vmatpush.bf16.xpose.msra.mxu0 %v181
      %191 = vmatmul.bf16.gmra.mxu0 %v178
      %v192 = vpop.f32.mrf.mxu0
      %v193 = vadd.f32 0.0, %v192
      %v194 = vpop.f32.mrf.mxu0
      %195 = vdwg.mxu0
      %v196 = vmul.f32 %v193, 0.35355338
      %v197 = vsel %vm118, %v196, -inf
      %198 = vmax.xlane.f32.xlu0 %v197
      %v199 = vpop.xlane.xlu0 %198
      %v200 = vsub.f32 %v196, %v199
      %v201 = vmul.f32 %v200, 1.442695
      %v202 = vpow.pop %v201
      %v203 = vsel %vm118, %v202, 0.0
      %204 = vadd.xlane.f32.xlu0 %v203
      %v205 = vpop.xlane.xlu0 %204
      %v206 = vrcp.pop %v205
      %v207 = vmul.f32 %v202, %v206
      %v208 = vpack.c.bf16 %v207, %v207
      %209 = vrot.lane.b32.xlu0 %v114, 56
      %v210 = vpop.permute.xlu0 %209
      %v212 = vsel %vm118, %v208, 0
      %v215 = vsel %vm156, %v210, 0
      %217 = vmatpush.bf16.msra.mxu0 0
      %218 = vmatpush.bf16.msra.mxu0 0
      %219 = vmatpush.bf16.msra.mxu0 0
      %220 = vmatpush.bf16.msra.mxu0 0
      %221 = vmatpush.bf16.msra.mxu0 0
      %222 = vmatpush.bf16.msra.mxu0 0
      %223 = vmatpush.bf16.msra.mxu0 0
      %224 = vmatpush.bf16.msra.mxu0 %v215
      %225 = vmatmul.bf16.gmra.mxu0 %v212
      %v226 = vpop.f32.mrf.mxu0
      %v227 = vadd.f32 0.0, %v226
      %v228 = vpop.f32.mrf.mxu0
      %229 = vdwg.mxu0
      %230 = vrot.lane.b32.xlu0 %v114, 112
      %v231 = vpop.permute.xlu0 %230
      %232 = vrot.lane.b32.xlu0 %v114, 80
      %v233 = vpop.permute.xlu0 %232
      %v235 = vsel %vm118, %v231, 0
      %v238 = vsel %vm118, %v233, 0
      %240 = vmatpush.bf16.xpose.msra.mxu0 0
      %241 = vmatpush.bf16.xpose.msra.mxu0 0
      %242 = vmatpush.bf16.xpose.msra.mxu0 0
      %243 = vmatpush.bf16.xpose.msra.mxu0 0
      %244 = vmatpush.bf16.xpose.msra.mxu0 0
      %245 = vmatpush.bf16.xpose.msra.mxu0 0
      %246 = vmatpush.bf16.xpose.msra.mxu0 0
      %247 = vmatpush.bf16.xpose.msra.mxu0 %v238
      %248 = vmatmul.bf16.gmra.mxu0 %v235
      %v249 = vpop.f32.mrf.mxu0
      %v250 = vadd.f32 0.0, %v249
      %v251 = vpop.f32.mrf.mxu0
      %252 = vdwg.mxu0
      %v253 = vmul.f32 %v250, 0.35355338
      %v254 = vsel %vm118, %v253, -inf
      %255 = vmax.xlane.f32.xlu0 %v254
      %v256 = vpop.xlane.xlu0 %255
      %v257 = vsub.f32 %v253, %v256
      %v258 = vmul.f32 %v257, 1.442695
      %v259 = vpow.pop %v258
      %v260 = vsel %vm118, %v259, 0.0
      %261 = vadd.xlane.f32.xlu0 %v260
      %v262 = vpop.xlane.xlu0 %261
      %v263 = vrcp.pop %v262
      %v264 = vmul.f32 %v259, %v263
      %v265 = vpack.c.bf16 %v264, %v264
      %266 = vrot.lane.b32.xlu0 %v114, 48
      %v267 = vpop.permute.xlu0 %266
      %v269 = vsel %vm118, %v265, 0
      %v272 = vsel %vm156, %v267, 0
      %274 = vmatpush.bf16.msra.mxu0 0
      %275 = vmatpush.bf16.msra.mxu0 0
      %276 = vmatpush.bf16.msra.mxu0 0
      %277 = vmatpush.bf16.msra.mxu0 0
      %278 = vmatpush.bf16.msra.mxu0 0
      %279 = vmatpush.bf16.msra.mxu0 0
      %280 = vmatpush.bf16.msra.mxu0 0
      %281 = vmatpush.bf16.msra.mxu0 %v272
      %282 = vmatmul.bf16.gmra.mxu0 %v269
      %v283 = vpop.f32.mrf.mxu0
      %v284 = vadd.f32 0.0, %v283
      %v285 = vpop.f32.mrf.mxu0
      %286 = vdwg.mxu0
      %287 = vrot.lane.b32.xlu0 %v114, 104
      %v288 = vpop.permute.xlu0 %287
      %289 = vrot.lane.b32.xlu0 %v114, 72
      %v290 = vpop.permute.xlu0 %289
      %v292 = vsel %vm118, %v288, 0
      %v295 = vsel %vm118, %v290, 0
      %297 = vmatpush.bf16.xpose.msra.mxu0 0
      %298 = vmatpush.bf16.xpose.msra.mxu0 0
      %299 = vmatpush.bf16.xpose.msra.mxu0 0
      %300 = vmatpush.bf16.xpose.msra.mxu0 0
      %301 = vmatpush.bf16.xpose.msra.mxu0 0
      %302 = vmatpush.bf16.xpose.msra.mxu0 0
      %303 = vmatpush.bf16.xpose.msra.mxu0 0
      %304 = vmatpush.bf16.xpose.msra.mxu0 %v295
      %305 = vmatmul.bf16.gmra.mxu0 %v292
      %v306 = vpop.f32.mrf.mxu0
      %v307 = vadd.f32 0.0, %v306
      %v308 = vpop.f32.mrf.mxu0
      %309 = vdwg.mxu0
      %v310 = vmul.f32 %v307, 0.35355338
      %v311 = vsel %vm118, %v310, -inf
      %312 = vmax.xlane.f32.xlu0 %v311
      %v313 = vpop.xlane.xlu0 %312
      %v314 = vsub.f32 %v310, %v313
      %v315 = vmul.f32 %v314, 1.442695
      %v316 = vpow.pop %v315
      %v317 = vsel %vm118, %v316, 0.0
      %318 = vadd.xlane.f32.xlu0 %v317
      %v319 = vpop.xlane.xlu0 %318
      %v320 = vrcp.pop %v319
      %v321 = vmul.f32 %v316, %v320
      %v322 = vpack.c.bf16 %v321, %v321
      %323 = vrot.lane.b32.xlu0 %v114, 40
      %v324 = vpop.permute.xlu0 %323
      %v326 = vsel %vm118, %v322, 0
      %v329 = vsel %vm156, %v324, 0
      %331 = vmatpush.bf16.msra.mxu0 0
      %332 = vmatpush.bf16.msra.mxu0 0
      %333 = vmatpush.bf16.msra.mxu0 0
      %334 = vmatpush.bf16.msra.mxu0 0
      %335 = vmatpush.bf16.msra.mxu0 0
      %336 = vmatpush.bf16.msra.mxu0 0
      %337 = vmatpush.bf16.msra.mxu0 0
      %338 = vmatpush.bf16.msra.mxu0 %v329
      %339 = vmatmul.bf16.gmra.mxu0 %v326
      %v340 = vpop.f32.mrf.mxu0
      %v341 = vadd.f32 0.0, %v340
      %v342 = vpop.f32.mrf.mxu0
      %343 = vdwg.mxu0
      %345 = vrot.lane.b32.xlu0 %v227, 8
      %v346 = vpop.permute.xlu0 %345
      %349 = vrot.lane.b32.xlu0 %v284, 16
      %v350 = vpop.permute.xlu0 %349
      %353 = vrot.lane.b32.xlu0 %v341, 24
      %v354 = vpop.permute.xlu0 %353
      %v356 = vsel %vm118, %v170, %v346
      %vm357 = vcmask 130048
      %v358 = vsel %vm357, %v356, %v350
      %vm359 = vcmask 195584
      %v360 = vsel %vm359, %v358, %v354
      %vm361 = vcmask 261120
      %362 = vst.msk [vmem:[%s111] sm:$0xff] %vm361, %v360
      %p363 = scmp.lt.s32.totalorder %s12, 1
      %s364 = scalar_select %p363, %s12, 1
      %s365 = smul.addr %s364, 8
      %s366 = scalar_lea.vmem %s1, %s365
      // Predicated region
      $region25: #{transformer_forward.11} parent=23 // pred_check
        %p367 = pneg %p56
      $region26: #{transformer_forward.11} parent=23 // pred_check_branch
        %369 = sbr.rel (%p367) target = $region28
      $region27: #{transformer_forward.11} parent=23 // pred_region
        _
      $region28: #{transformer_forward.11} parent=23 // pred_fallthru
        _
    $region24: #{transformer_forward.11} parent=5 // pred_fallthru
      _
    %p370 = scmp.le.s32.totalorder 2, %s7
    // Predicated region
    $region29: #{transformer_forward.11} parent=5 // pred_check
      %p371 = pneg %p370
    $region30: #{transformer_forward.11} parent=5 // pred_check_branch
      %373 = sbr.rel (%p371) target = $region32
    $region31: #{transformer_forward.11} parent=5 // pred_region
      %s374 = ssub.s32 %s7, 2
      // Predicated region
      $region33: #{transformer_forward.11} parent=31 // pred_check
        %p375 = pneg %p62
      $region34: #{transformer_forward.11} parent=31 // pred_check_branch
        %377 = sbr.rel (%p375) target = $region36
      $region35: #{transformer_forward.11} parent=31 // pred_region
        %p378 = scmp.lt.s32.totalorder %s13, 1
        %s379 = scalar_select %p378, %s13, 1
        %s380 = smul.addr %s379, 8
        %s381 = scalar_lea.vmem %s1, %s380
      $region36: #{transformer_forward.11} parent=31 // pred_fallthru
        _
    $region32: #{transformer_forward.11} parent=5 // pred_fallthru
      _
  $region6: #{transformer_forward.11} parent=0 // loop_footer
    %s11 = sadd.s32 1, %s7
  $region7: #{transformer_forward.11} parent=0 // loop_footer_branch
    %6 = sbr.rel target = $region3
  $region8: #{transformer_forward.11} parent=0 // loop_exit
    _

// kernel: transformer_forward.13
$region0: #{transformer_forward.13}
  #allocation0 [shape = 'u32[]', space=smem, size = 0x4, offset = 0x4, fixed_abs, tag = 'smem constant byte address 0x4 - core index']
  #allocation1 [shape = 'u32[72,128]{1,0:T(1,128)}', space=vmem, size = 0x9000, scoped, tag = 'internal scratch']
  %s0 = inlined_call_operand.vmem [shape: f32[16,32], index: 0, kind: input, shape index: {}]
  %s1 = inlined_call_operand.vmem [shape: f32[1,32], index: 1, kind: input, shape index: {}]
  %s2 = inlined_call_operand.vmem [shape: f32[1,32], index: 2, kind: input, shape index: {}]
  %s3 = inlined_call_operand.vmem [shape: bf16[32,64], index: 3, kind: input, shape index: {}]
  %s4 = inlined_call_operand.vmem [shape: f32[1,64], index: 4, kind: input, shape index: {}]
  %s5 = inlined_call_operand.vmem [shape: f32[16,64], index: 5, kind: output, shape index: {}]
  %s6 = sld [smem:[#allocation0]]
  $region30: #{transformer_forward.13} parent=0
    _
  %s8 = ssub.s32 1, %s6
  %s9 = scalar_select 0, %s8, %s6
  // Predicated region
  $region2: #{transformer_forward.13} parent=0 // pred_check
    _
  $region3: #{transformer_forward.13} parent=0 // pred_check_branch
    %11 = sbr.rel (0) target = $region5
  $region4: #{transformer_forward.13} parent=0 // pred_region
    _
  $region5: #{transformer_forward.13} parent=0 // pred_fallthru
    _
  // Predicated region
  $region6: #{transformer_forward.13} parent=0 // pred_check
    _
  $region7: #{transformer_forward.13} parent=0 // pred_check_branch
    %13 = sbr.rel (0) target = $region9
  $region8: #{transformer_forward.13} parent=0 // pred_region
    _
  $region9: #{transformer_forward.13} parent=0 // pred_fallthru
    _
  // Predicated region
  $region10: #{transformer_forward.13} parent=0 // pred_check
    _
  $region11: #{transformer_forward.13} parent=0 // pred_check_branch
    %15 = sbr.rel (0) target = $region13
  $region12: #{transformer_forward.13} parent=0 // pred_region
    _
  $region13: #{transformer_forward.13} parent=0 // pred_fallthru
    _
  // Predicated region
  $region14: #{transformer_forward.13} parent=0 // pred_check
    _
  $region15: #{transformer_forward.13} parent=0 // pred_check_branch
    %17 = sbr.rel (0) target = $region17
  $region16: #{transformer_forward.13} parent=0 // pred_region
    _
  $region17: #{transformer_forward.13} parent=0 // pred_fallthru
    _
  // Predicated region
  $region18: #{transformer_forward.13} parent=0 // pred_check
    _
  $region19: #{transformer_forward.13} parent=0 // pred_check_branch
    %19 = sbr.rel (0) target = $region21
  $region20: #{transformer_forward.13} parent=0 // pred_region
    _
  $region21: #{transformer_forward.13} parent=0 // pred_fallthru
    _
  %v21 = vld [vmem:[%s0] sm:$0xff]
  %v22 = vld [vmem:[%s0 + $0x8] sm:$0xff]
  %vm23 = vcmask 261120
  %v24 = vsel %vm23, %v21, 0.0
  %25 = vadd.xlane.f32.xlu0 %v24
  %v26 = vpop.xlane.xlu0 %25
  %v27 = vsel %vm23, %v22, 0.0
  %28 = vadd.xlane.f32.xlu0 %v27
  %v29 = vpop.xlane.xlu0 %28
  %v30 = vrcp.pop 32.0
  %v31 = vmul.f32 32.0, %v30
  %v32 = vsub.f32 1.0, %v31
  %v33 = vmul.f32 %v30, %v32
  %v34 = vadd.f32 %v30, %v33
  %vm35 = vweird.f32 %v30
  %v36 = vsel %vm35, %v30, %v34
  %v37 = vmul.f32 %v26, %v36
  %v38 = vmul.f32 %v29, %v36
  %v39 = vsub.f32 %v21, %v37
  %v40 = vsub.f32 %v22, %v38
  %v41 = vmul.f32 %v39, %v39
  %v42 = vmul.f32 %v40, %v40
  %v43 = vsel %vm23, %v41, 0.0
  %44 = vadd.xlane.f32.xlu0 %v43
  %v45 = vpop.xlane.xlu0 %44
  %v46 = vsel %vm23, %v42, 0.0
  %47 = vadd.xlane.f32.xlu0 %v46
  %v48 = vpop.xlane.xlu0 %47
  %v49 = vmul.f32 %v45, %v36
  %v50 = vmul.f32 %v48, %v36
  %v51 = vadd.f32 %v49, 1e-05
  %v52 = vadd.f32 %v50, 1e-05
  %v53 = vrsqrt.pop %v51
  %v54 = vmul.f32 %v53, %v51
  %v55 = vmul.f32 %v54, %v53
  %v56 = vmul.f32 0.5, %v55
  %v57 = vsub.f32 1.5, %v56
  %v58 = vmul.f32 %v53, %v57
  %vm59 = vweird.f32 %v51
  %vm60 = vweird.f32 %v53
  %vm61 = vmor %vm59, %vm60
  %v62 = vsel %vm61, %v53, %v58
  %v63 = vrsqrt.pop %v52
  %v64 = vmul.f32 %v63, %v52
  %v65 = vmul.f32 %v64, %v63
  %v66 = vmul.f32 0.5, %v65
  %v67 = vsub.f32 1.5, %v66
  %v68 = vmul.f32 %v63, %v67
  %vm69 = vweird.f32 %v52
  %vm70 = vweird.f32 %v63
  %vm71 = vmor %vm69, %vm70
  %v72 = vsel %vm71, %v63, %v68
  %v73 = vmul.f32 %v39, %v62
  %v74 = vmul.f32 %v40, %v72
  %v75 = vld [vmem:[%s1] sm:$0x1]
  %v77 = vperm.slane %v75, 0
  %v79 = vmul.f32 %v73, %v77
  %v80 = vmul.f32 %v74, %v77
  %v81 = vld [vmem:[%s2] sm:$0x1]
  %v83 = vperm.slane %v81, 0
  %v85 = vadd.f32 %v79, %v83
  %v86 = vadd.f32 %v80, %v83
  %v87 = vpack.c.bf16 %v86, %v85
  %v88 = vld [vmem:[%s3] sm:$0xf]
  %v89 = vld [vmem:[%s3 + $0x4] sm:$0xf]
  %v90 = vld [vmem:[%s3 + $0x8] sm:$0xf]
  %v91 = vld [vmem:[%s3 + $0xc] sm:$0xf]
  %v92 = vld [vmem:[%s4] sm:$0x1]
  %v94 = vperm.slane %v92, 0
  %v100 = vunpack.c.l.b16 %v88
  %v101 = vunpack.c.l.b16 %v89
  %v102 = vunpack.c.l.b16 %v90
  %v103 = vunpack.c.l.b16 %v91
  %v104 = vpack.c.b16 %v101, %v100
  %v105 = vpack.c.b16 %v103, %v102
  %v109 = vsel %vm23, %v87, 0
  %111 = vmatpush.bf16.msra.mxu0 0
  %112 = vmatpush.bf16.msra.mxu0 0
  %113 = vmatpush.bf16.msra.mxu0 0
  %114 = vmatpush.bf16.msra.mxu0 0
  %115 = vmatpush.bf16.msra.mxu0 0
  %116 = vmatpush.bf16.msra.mxu0 0
  %117 = vmatpush.bf16.msra.mxu0 %v105
  %118 = vmatpush.bf16.msra.mxu0 %v104
  %119 = vmatmul.bf16.gmra.mxu0 %v109
  %v120 = vpop.f32.mrf.mxu0
  %v121 = vadd.f32 %v94, %v120
  %v122 = vpop.f32.mrf.mxu0
  %v123 = vadd.f32 %v94, %v122
  %124 = vdwg.mxu0
  %v125 = vmul.f32 %v121, 0.5
  %v126 = vmul.f32 %v123, 0.5
  %v127 = vmul.f32 %v121, 0.70710677
  %v128 = vmul.f32 %v123, 0.70710677
  %v129 = vmul.f32 %v127, %v127
  %v130 = vmin.f32 16.0, %v129
  %v131 = vmul.f32 %v130, 2.1237322e-06
  %v132 = vadd.f32 %v131, 0.00028619796
  %v133 = vmul.f32 %v130, %v132
  %v134 = vadd.f32 %v133, 0.0036580483
  %v135 = vmul.f32 %v130, %v134
  %v136 = vadd.f32 %v135, 0.05243302
  %v137 = vmul.f32 %v130, %v136
  %v138 = vadd.f32 %v137, 0.18741608
  %v139 = vmul.f32 %v130, %v138
  %v140 = vadd.f32 %v139, 1.1283791
  %v141 = vmul.f32 %v127, %v140
  %v142 = vmul.f32 %v130, 3.8918573e-05
  %v143 = vadd.f32 %v142, 0.001143296
  %v144 = vmul.f32 %v130, %v143
  %v145 = vadd.f32 %v144, 0.014752088
  %v146 = vmul.f32 %v130, %v145
  %v147 = vadd.f32 %v146, 0.112945676
  %v148 = vmul.f32 %v130, %v147
  %v149 = vadd.f32 %v148, 0.4994258
  %v150 = vmul.f32 %v130, %v149
  %v151 = vadd.f32 %v150, 1.0
  %v152 = vrcp.pop %v151
  %v153 = vmul.f32 %v151, %v152
  %v154 = vsub.f32 1.0, %v153
  %v155 = vmul.f32 %v152, %v154
  %v156 = vadd.f32 %v152, %v155
  %vm157 = vweird.f32 %v151
  %vm158 = vweird.f32 %v152
  %vm159 = vmor %vm157, %vm158
  %v160 = vsel %vm159, %v152, %v156
  %v161 = vand.u32 2147483647, %v151
  %vm162 = vcmp.eq.f32.partialorder %v161, 8.507059e+37
  %v163 = vand.u32 %v151, 2147483648
  %v164 = vor.u32 1.1754944e-38, %v163
  %v165 = vsel %vm162, %v164, %v160
  %v166 = vmul.f32 %v141, %v165
  %v167 = vmin.f32 %v166, 1.0
  %v168 = vmax.f32 %v167, -1.0
  %v169 = vmul.f32 %v128, %v128
  %v170 = vmin.f32 16.0, %v169
  %v171 = vmul.f32 %v170, 2.1237322e-06
  %v172 = vadd.f32 %v171, 0.00028619796
  %v173 = vmul.f32 %v170, %v172
  %v174 = vadd.f32 %v173, 0.0036580483
  %v175 = vmul.f32 %v170, %v174
  %v176 = vadd.f32 %v175, 0.05243302
  %v177 = vmul.f32 %v170, %v176
  %v178 = vadd.f32 %v177, 0.18741608
  %v179 = vmul.f32 %v170, %v178
  %v180 = vadd.f32 %v179, 1.1283791
  %v181 = vmul.f32 %v128, %v180
  %v182 = vmul.f32 %v170, 3.8918573e-05
  %v183 = vadd.f32 %v182, 0.001143296
  %v184 = vmul.f32 %v170, %v183
  %v185 = vadd.f32 %v184, 0.014752088
  %v186 = vmul.f32 %v170, %v185
  %v187 = vadd.f32 %v186, 0.112945676
  %v188 = vmul.f32 %v170, %v187
  %v189 = vadd.f32 %v188, 0.4994258
  %v190 = vmul.f32 %v170, %v189
  %v191 = vadd.f32 %v190, 1.0
  %v192 = vrcp.pop %v191
  %v193 = vmul.f32 %v191, %v192
  %v194 = vsub.f32 1.0, %v193
  %v195 = vmul.f32 %v192, %v194
  %v196 = vadd.f32 %v192, %v195
  %vm197 = vweird.f32 %v191
  %vm198 = vweird.f32 %v192
  %vm199 = vmor %vm197, %vm198
  %v200 = vsel %vm199, %v192, %v196
  %v201 = vand.u32 2147483647, %v191
  %vm202 = vcmp.eq.f32.partialorder %v201, 8.507059e+37
  %v203 = vand.u32 %v191, 2147483648
  %v204 = vor.u32 1.1754944e-38, %v203
  %v205 = vsel %vm202, %v204, %v200
  %v206 = vmul.f32 %v181, %v205
  %v207 = vmin.f32 %v206, 1.0
  %v208 = vmax.f32 %v207, -1.0
  %v209 = vadd.f32 %v168, 1.0
  %v210 = vadd.f32 %v208, 1.0
  %v211 = vmul.f32 %v125, %v209
  %v212 = vmul.f32 %v126, %v210
  %vm213 = vcmask 523264
  %214 = vst.msk [vmem:[%s5] sm:$0xff] %vm213, %v211
  %215 = vst.msk [vmem:[%s5 + $0x8] sm:$0xff] %vm213, %v212
  // Predicated region
  $region22: #{transformer_forward.13} parent=0 // pred_check
    _
  $region23: #{transformer_forward.13} parent=0 // pred_check_branch
    %217 = sbr.rel (0) target = $region25
  $region24: #{transformer_forward.13} parent=0 // pred_region
    _
  $region25: #{transformer_forward.13} parent=0 // pred_fallthru
    _
  // Predicated region
  $region26: #{transformer_forward.13} parent=0 // pred_check
    _
  $region27: #{transformer_forward.13} parent=0 // pred_check_branch
    %219 = sbr.rel (0) target = $region29
  $region28: #{transformer_forward.13} parent=0 // pred_region
    _
  $region29: #{transformer_forward.13} parent=0 // pred_fallthru
    _

// kernel: transformer_forward.14
$region0: #{transformer_forward.14}
  #allocation0 [shape = 'u32[]', space=smem, size = 0x4, offset = 0x4, fixed_abs, tag = 'smem constant byte address 0x4 - core index']
  #allocation1 [shape = 'u32[72,128]{1,0:T(1,128)}', space=vmem, size = 0x9000, scoped, tag = 'internal scratch']
  %s0 = inlined_call_operand.vmem [shape: f32[16,64], index: 0, kind: input, shape index: {}]
  %s1 = inlined_call_operand.vmem [shape: bf16[64,32], index: 1, kind: input, shape index: {}]
  %s2 = inlined_call_operand.vmem [shape: f32[1,32], index: 2, kind: input, shape index: {}]
  %s3 = inlined_call_operand.vmem [shape: f32[16,32], index: 3, kind: input, shape index: {}, may-alias: {3,4}]
  %s4 = inlined_call_operand.vmem [shape: f32[16,32], index: 4, kind: output, shape index: {}, may-alias: {3,4}]
  %s5 = sld [smem:[#allocation0]]
  $region26: #{transformer_forward.14} parent=0
    _
  %s7 = ssub.s32 1, %s5
  %s8 = scalar_select 0, %s7, %s5
  // Predicated region
  $region2: #{transformer_forward.14} parent=0 // pred_check
    _
  $region3: #{transformer_forward.14} parent=0 // pred_check_branch
    %10 = sbr.rel (0) target = $region5
  $region4: #{transformer_forward.14} parent=0 // pred_region
    _
  $region5: #{transformer_forward.14} parent=0 // pred_fallthru
    _
  // Predicated region
  $region6: #{transformer_forward.14} parent=0 // pred_check
    _
  $region7: #{transformer_forward.14} parent=0 // pred_check_branch
    %12 = sbr.rel (0) target = $region9
  $region8: #{transformer_forward.14} parent=0 // pred_region
    _
  $region9: #{transformer_forward.14} parent=0 // pred_fallthru
    _
  // Predicated region
  $region10: #{transformer_forward.14} parent=0 // pred_check
    _
  $region11: #{transformer_forward.14} parent=0 // pred_check_branch
    %14 = sbr.rel (0) target = $region13
  $region12: #{transformer_forward.14} parent=0 // pred_region
    _
  $region13: #{transformer_forward.14} parent=0 // pred_fallthru
    _
  // Predicated region
  $region14: #{transformer_forward.14} parent=0 // pred_check
    _
  $region15: #{transformer_forward.14} parent=0 // pred_check_branch
    %16 = sbr.rel (0) target = $region17
  $region16: #{transformer_forward.14} parent=0 // pred_region
    _
  $region17: #{transformer_forward.14} parent=0 // pred_fallthru
    _
  %v18 = vld [vmem:[%s0] sm:$0xff]
  %v19 = vld [vmem:[%s0 + $0x8] sm:$0xff]
  %v20 = vpack.c.bf16 %v19, %v18
  %v21 = vld [vmem:[%s1] sm:$0xf]
  %v22 = vld [vmem:[%s1 + $0x4] sm:$0xf]
  %v23 = vld [vmem:[%s1 + $0x8] sm:$0xf]
  %v24 = vld [vmem:[%s1 + $0xc] sm:$0xf]
  %v25 = vld [vmem:[%s1 + $0x10] sm:$0xf]
  %v26 = vld [vmem:[%s1 + $0x14] sm:$0xf]
  %v27 = vld [vmem:[%s1 + $0x18] sm:$0xf]
  %v28 = vld [vmem:[%s1 + $0x1c] sm:$0xf]
  %v29 = vld [vmem:[%s2] sm:$0x1]
  %v31 = vperm.slane %v29, 0
  %v41 = vunpack.c.l.b16 %v21
  %v42 = vunpack.c.l.b16 %v22
  %v43 = vunpack.c.l.b16 %v23
  %v44 = vunpack.c.l.b16 %v24
  %v45 = vunpack.c.l.b16 %v25
  %v46 = vunpack.c.l.b16 %v26
  %v47 = vunpack.c.l.b16 %v27
  %v48 = vunpack.c.l.b16 %v28
  %v49 = vpack.c.b16 %v42, %v41
  %v50 = vpack.c.b16 %v44, %v43
  %v51 = vpack.c.b16 %v46, %v45
  %v52 = vpack.c.b16 %v48, %v47
  %vm57 = vcmask 523264
  %v59 = vsel %vm57, %v20, 0
  %61 = vmatpush.bf16.msra.mxu0 0
  %62 = vmatpush.bf16.msra.mxu0 0
  %63 = vmatpush.bf16.msra.mxu0 0
  %64 = vmatpush.bf16.msra.mxu0 0
  %65 = vmatpush.bf16.msra.mxu0 %v52
  %66 = vmatpush.bf16.msra.mxu0 %v51
  %67 = vmatpush.bf16.msra.mxu0 %v50
  %68 = vmatpush.bf16.msra.mxu0 %v49
  %69 = vmatmul.bf16.gmra.mxu0 %v59
  %v70 = vpop.f32.mrf.mxu0
  %v71 = vadd.f32 %v31, %v70
  %v72 = vpop.f32.mrf.mxu0
  %v73 = vadd.f32 %v31, %v72
  %74 = vdwg.mxu0
  %v75 = vld [vmem:[%s3] sm:$0xff]
  %v76 = vld [vmem:[%s3 + $0x8] sm:$0xff]
  %v77 = vadd.f32 %v71, %v75
  %v78 = vadd.f32 %v73, %v76
  %vm79 = vcmask 261120
  %80 = vst.msk [vmem:[%s4] sm:$0xff] %vm79, %v77
  %81 = vst.msk [vmem:[%s4 + $0x8] sm:$0xff] %vm79, %v78
  // Predicated region
  $region18: #{transformer_forward.14} parent=0 // pred_check
    _
  $region19: #{transformer_forward.14} parent=0 // pred_check_branch
    %83 = sbr.rel (0) target = $region21
  $region20: #{transformer_forward.14} parent=0 // pred_region
    _
  $region21: #{transformer_forward.14} parent=0 // pred_fallthru
    _
  // Predicated region
  $region22: #{transformer_forward.14} parent=0 // pred_check
    _
  $region23: #{transformer_forward.14} parent=0 // pred_check_branch
    %85 = sbr.rel (0) target = $region25
  $region24: #{transformer_forward.14} parent=0 // pred_region
    _
  $region25: #{transformer_forward.14} parent=0 // pred_fallthru
    _

</llo_original>
